<compile_context>
chip_gen: v7x
topology: tpu7x:2x2x1
jax: 0.10.0
libtpu: 0.0.40
codegen_flags: <defaults>
</compile_context>

<pallas_src>
import numpy as np

import jax
import jax.numpy as jnp
from jax import lax
from jax.experimental import pallas as pl
from jax.experimental.pallas import tpu as pltpu


# ----------------------------- configuration -------------------------------
CHANNELS = 4          # input channels
SEG_WIDTH = 16        # L (sequence length)
N_CLASSES = 3
LAYERS = 2            # number of gated residual blocks (dilation 2**i)
RES_PC = 8            # res_channels_pc
SKIP_PC = 8           # skip_channels_pc
KERNEL_SIZE = 2
BATCH = 2

C = CHANNELS
L = SEG_WIDTH
R = RES_PC * CHANNELS       # res_channels   = 32
S = SKIP_PC * CHANNELS      # skip_channels  = 32
NC = N_CLASSES
BN_EPS = 1e-5
OUT_PAD = 128               # lane-dense padded output width


# ------------------------------ Pallas kernel -------------------------------
def make_wavenet_kernel(layers, m_blk):
    def kernel(x_ref,                     # (m_blk, C)       fused (batch*time, C) rows
               whead_ref, bhead_ref,      # (C, R), (1, R)   head conv with BN folded in
               shift_ref,                 # (layers, m_blk, m_blk)  block-diag causal shifts
               bnsc_ref, bnsh_ref,        # (layers, 1, R)   block BN scale / shift (eval)
               wgate_ref, bgate_ref,      # (layers, 2R, 2R), (layers, 1, 2R) fused tanh+sigmoid conv
               wrs_ref, brs_ref,          # (layers, R, R+S), (layers, 1, R+S) fused res+skip conv
               wt1_ref, bt1_ref,          # (S, S), (1, S)   tail conv 1
               wt2_ref, bt2_ref,          # (S, S), (1, S)   tail conv 2
               wcat_ref,                  # (S, L*NC)        final Linear, time-major columns
               lmask_ref,                 # (m_blk, L*NC)    selects the row's own time block
               bsel_ref,                  # (nb, m_blk)      per-batch row-sum matrix
               selpad_ref,                # (L*NC, OUT_PAD)  folds t' blocks -> class lanes (padded)
               blin_ref,                  # (1, OUT_PAD)     final Linear bias (padded)
               out_ref):                  # (1, nb, OUT_PAD)
        x = x_ref[...]                                                       # (m_blk, C)
        # ---- head: BN folded into grouped 1x1 conv ----
        h = (jnp.dot(x, whead_ref[...], preferred_element_type=jnp.float32)
             + bhead_ref[...])                                               # (m_blk, R)

        skip_sum = jnp.zeros((m_blk, S), jnp.float32)
        for i in range(layers):
            # block BatchNorm (eval)
            xb = h * bnsc_ref[i] + bnsh_ref[i]                               # (m_blk, R)
            # causal dilated shift by 2**i: block-diagonal shift matrix per batch element
            xs = jnp.dot(shift_ref[i], xb, preferred_element_type=jnp.float32)
            # fused tanh/sigmoid dilated conv (kernel_size=2):
            #   [xs | xb] @ Wgate  ==  xs @ Wgate_top + xb @ Wgate_bot   (no concat copy)
            wg = wgate_ref[i]                                                # (2R, 2R)
            pre = (jnp.dot(xs, wg[:R, :], preferred_element_type=jnp.float32)
                   + jnp.dot(xb, wg[R:, :], preferred_element_type=jnp.float32)
                   + bgate_ref[i])                                           # (m_blk, 2R)
            gpc = jnp.tanh(pre[:, :R]) * jax.nn.sigmoid(pre[:, R:])          # (m_blk, R)
            # fused residual + skip 1x1 grouped convs: one matmul
            rs = (jnp.dot(gpc, wrs_ref[i], preferred_element_type=jnp.float32)
                  + brs_ref[i])                                              # (m_blk, R+S)
            h = rs[:, :R] + xb
            skip_sum = skip_sum + rs[:, R:]

        # ---- tail: ReLU -> 1x1 conv -> ReLU -> 1x1 conv ----
        t = jnp.maximum(skip_sum, 0.0)
        t = jnp.dot(t, wt1_ref[...], preferred_element_type=jnp.float32) + bt1_ref[...]
        t = jnp.maximum(t, 0.0)
        t = jnp.dot(t, wt2_ref[...], preferred_element_type=jnp.float32) + bt2_ref[...]

        # ---- Flatten + Linear as MXU contractions ----
        # g[m, t'*NC+o] = sum_c t[m,c] * wlin[o, c*L+t']; keep only t' == time(m)
        g = (jnp.dot(t, wcat_ref[...], preferred_element_type=jnp.float32)
             * lmask_ref[...])                                               # (m_blk, L*NC)
        per_row = jnp.dot(g, selpad_ref[...],
                          preferred_element_type=jnp.float32)               # (m_blk, OUT_PAD)
        y = (jnp.dot(bsel_ref[...], per_row,
                     preferred_element_type=jnp.float32)
             + blin_ref[...])                                                # (nb, OUT_PAD)
        out_ref[0] = y

    return kernel


def pick_batch_tile(n, l, max_rows=512):
    """Largest divisor of n with nb*l <= max_rows (at least 1)."""
    nb = max(1, min(n, max_rows // l))
    while n % nb != 0:
        nb -= 1
    return nb


def run_wavenet_kernel(x_nlc, kparams, nb):
    """x_nlc: (N, L, C) float32; kparams: parameter arrays built for batch tile nb."""
    n = x_nlc.shape[0]
    assert n % nb == 0
    num_blocks = n // nb
    m_blk = nb * L
    x_flat = x_nlc.reshape(n * L, C)                                   # row m = b*L + t

    in_specs = [pl.BlockSpec((m_blk, C), lambda b: (b, 0))]
    for a in kparams:
        in_specs.append(pl.BlockSpec(a.shape, lambda b, _nd=a.ndim: (0,) * _nd))
    out_spec = pl.BlockSpec((1, nb, OUT_PAD), lambda b: (b, 0, 0))

    out = pl.pallas_call(
        make_wavenet_kernel(LAYERS, m_blk),
        out_shape=jax.ShapeDtypeStruct((num_blocks, nb, OUT_PAD), jnp.float32),
        grid_spec=pltpu.PrefetchScalarGridSpec(
            num_scalar_prefetch=0,
            grid=(num_blocks,),
            in_specs=in_specs,
            out_specs=out_spec,
        ),
        compiler_params=pltpu.CompilerParams(dimension_semantics=("parallel",)),
    )(x_flat, *kparams)
    return out.reshape(n, OUT_PAD)[:, :NC]                             # (N, NC)


# --------------------------- parameter construction -------------------------
def init_params():
    key = jax.random.PRNGKey(0)
    keys = iter(jax.random.split(key, 256))

    def nrm(shape, scale=0.1):
        return scale * jax.random.normal(next(keys), shape, dtype=jnp.float32)

    def bn_params(c):
        gamma = 1.0 + nrm((c,))
        beta = nrm((c,))
        mean = nrm((c,))
        var = 0.5 + jax.random.uniform(next(keys), (c,), dtype=jnp.float32)
        return (gamma, beta, mean, var)

    p = {}
    p["head_bn"] = bn_params(C)
    p["head_w"] = nrm((R, 1, 1))                       # Conv1d(C, R, 1, groups=C, bias=False)
    p["blocks"] = []
    for _ in range(LAYERS):
        blk = {
            "bn": bn_params(R),
            "wt": nrm((R, R // C, KERNEL_SIZE)), "bt": nrm((R,)),
            "ws": nrm((R, R // C, KERNEL_SIZE)), "bs": nrm((R,)),
            "wres": nrm((R, R // C, 1)), "bres": nrm((R,)),
            "wskip": nrm((S, R // C, 1)), "bskip": nrm((S,)),
        }
        p["blocks"].append(blk)
    p["wt1"] = nrm((S, S, 1)); p["bt1"] = nrm((S,))
    p["wt2"] = nrm((S, S, 1)); p["bt2"] = nrm((S,))
    p["wlin"] = nrm((NC, S * L)); p["blin"] = nrm((NC,))
    return p


def bn_scale_shift(gamma, beta, mean, var):
    scale = gamma / jnp.sqrt(var + BN_EPS)
    shift = beta - mean * scale
    return scale, shift


def dense_from_grouped(w_tap, groups):
    """w_tap: (C_out, C_in_per_group) -> dense (C_in, C_out) block-diagonal matrix
    such that y = x @ dense reproduces the grouped conv tap."""
    c_out, cipg = w_tap.shape
    copg = c_out // groups
    c_in = cipg * groups
    dense = jnp.zeros((c_in, c_out), w_tap.dtype)
    for g in range(groups):
        block = w_tap[g * copg:(g + 1) * copg, :]                      # (copg, cipg)
        dense = dense.at[g * cipg:(g + 1) * cipg,
                         g * copg:(g + 1) * copg].set(block.T)
    return dense


def build_kernel_params(p, nb):
    m_blk = nb * L

    # ---- head: fold BN (eval) into the grouped 1x1 conv ----
    hsc, hsh = bn_scale_shift(*p["head_bn"])
    w_head0 = dense_from_grouped(p["head_w"][:, :, 0], groups=C)       # (C, R)
    w_head = hsc[:, None] * w_head0                                    # (C, R)
    b_head = hsh[None, :] @ w_head0                                    # (1, R)

    # ---- block-diagonal causal shift matrices over the fused row slab ----
    def blk_shift(d):
        eye_shift = np.eye(L, k=-d, dtype=np.float32)
        out = np.zeros((m_blk, m_blk), np.float32)
        for b in range(nb):
            out[b * L:(b + 1) * L, b * L:(b + 1) * L] = eye_shift
        return out
    shift_mats = jnp.asarray(np.stack([blk_shift(2 ** i) for i in range(LAYERS)]))

    bn_sc, bn_sh = [], []
    wgate, bgate, wrs, brs = [], [], [], []
    for blk in p["blocks"]:
        sc, sh = bn_scale_shift(*blk["bn"])
        bn_sc.append(sc[None, :]); bn_sh.append(sh[None, :])
        wt0 = dense_from_grouped(blk["wt"][:, :, 0], C)   # tap acting on x[t-d]
        wt1 = dense_from_grouped(blk["wt"][:, :, 1], C)   # tap acting on x[t]
        ws0 = dense_from_grouped(blk["ws"][:, :, 0], C)
        ws1 = dense_from_grouped(blk["ws"][:, :, 1], C)
        # rows 0:R act on xs, rows R:2R act on xb; cols 0:R -> pre_tanh, R:2R -> pre_sigmoid
        top = jnp.concatenate([wt0, ws0], axis=1)          # rows for xs
        bot = jnp.concatenate([wt1, ws1], axis=1)          # rows for xb
        wgate.append(jnp.concatenate([top, bot], axis=0))  # (2R, 2R)
        bgate.append(jnp.concatenate([blk["bt"], blk["bs"]])[None, :])   # (1, 2R)
        wres = dense_from_grouped(blk["wres"][:, :, 0], C)   # (R, R)
        wskip = dense_from_grouped(blk["wskip"][:, :, 0], C)  # (R, S)
        wrs.append(jnp.concatenate([wres, wskip], axis=1))   # (R, R+S)
        brs.append(jnp.concatenate([blk["bres"], blk["bskip"]])[None, :])  # (1, R+S)

    wt1 = p["wt1"][:, :, 0].T; bt1 = p["bt1"][None, :]
    wt2 = p["wt2"][:, :, 0].T; bt2 = p["bt2"][None, :]

    # ---- final Linear as matmuls ----
    # torch Flatten of (N, S, L) is channel-major: flat index = c*L + t.
    # Wcat[c, t*NC + o] = wlin[o, c*L + t]
    wlin3 = np.asarray(p["wlin"]).reshape(NC, S, L)                    # [o, c, t]
    wcat = jnp.asarray(np.transpose(wlin3, (1, 2, 0)).reshape(S, L * NC))
    # lmask[m, t'*NC + o] = (t' == m % L)
    mrows = np.arange(m_blk) % L
    tcols = np.arange(L * NC) // NC
    lmask = jnp.asarray((mrows[:, None] == tcols[None, :]).astype(np.float32))
    # selpad[t'*NC + o, j] = (j == o), padded to OUT_PAD lanes
    selpad = np.zeros((L * NC, OUT_PAD), np.float32)
    selpad[np.arange(L * NC), np.arange(L * NC) % NC] = 1.0
    selpad = jnp.asarray(selpad)
    # bsel[b, b*L + t] = 1 (per-batch-element row sum)
    bsel = np.zeros((nb, m_blk), np.float32)
    for b in range(nb):
        bsel[b, b * L:(b + 1) * L] = 1.0
    bsel = jnp.asarray(bsel)
    blin_pad = np.zeros((1, OUT_PAD), np.float32)
    blin_pad[0, :NC] = np.asarray(p["blin"])
    blin_pad = jnp.asarray(blin_pad)

    return [
        w_head, b_head, shift_mats,
        jnp.stack(bn_sc), jnp.stack(bn_sh),
        jnp.stack(wgate), jnp.stack(bgate),
        jnp.stack(wrs), jnp.stack(brs),
        wt1, bt1, wt2, bt2,
        wcat, lmask, bsel, selpad, blin_pad,
    ]


# ------------------------ pure-JAX reference (NCL, like torch) ----------------
def reference_forward(x_ncl, p):
    def bn(x, gamma, beta, mean, var):
        return ((x - mean[None, :, None]) / jnp.sqrt(var[None, :, None] + BN_EPS)
                * gamma[None, :, None] + beta[None, :, None])

    def conv1d(x, w, b=None, dilation=1, groups=1, pad_left=0):
        if pad_left:
            x = jnp.pad(x, ((0, 0), (0, 0), (pad_left, 0)))
        y = lax.conv_general_dilated(
            x, w, window_strides=(1,), padding="VALID",
            rhs_dilation=(dilation,),
            dimension_numbers=("NCH", "OIH", "NCH"),
            feature_group_count=groups)
        if b is not None:
            y = y + b[None, :, None]
        return y

    x = bn(x_ncl, *p["head_bn"])
    x = conv1d(x, p["head_w"], None, groups=C)
    prev = x
    skips = []
    for i in range(LAYERS):
        d = 2 ** i
        blk = p["blocks"][i]
        xb = bn(prev, *blk["bn"])
        t = jnp.tanh(conv1d(xb, blk["wt"], blk["bt"], dilation=d, groups=C,
                            pad_left=(KERNEL_SIZE - 1) * d))
        s = jax.nn.sigmoid(conv1d(xb, blk["ws"], blk["bs"], dilation=d, groups=C,
                                  pad_left=(KERNEL_SIZE - 1) * d))
        gpc = t * s
        prev = conv1d(gpc, blk["wres"], blk["bres"], groups=C) + xb
        skips.append(conv1d(gpc, blk["wskip"], blk["bskip"], groups=C))
    X = jnp.stack(skips).sum(axis=0)
    X = jax.nn.relu(X)
    X = conv1d(X, p["wt1"], p["bt1"])
    X = jax.nn.relu(X)
    X = conv1d(X, p["wt2"], p["bt2"])
    flat = X.reshape(X.shape[0], -1)                                   # (N, S*L), channel-major
    return flat @ p["wlin"].T + p["blin"][None, :]


# ----------------------------------- main -----------------------------------
if __name__ == "__main__":
    params = init_params()
    kx = jax.random.PRNGKey(42)
    x_ncl = jax.random.normal(kx, (BATCH, C, L), dtype=jnp.float32)    # PyTorch NCL input

    y_ref = reference_forward(x_ncl, params)

    nb = pick_batch_tile(BATCH, L)                                     # batch elems per grid step
    kparams = build_kernel_params(params, nb)
    x_nlc = jnp.transpose(x_ncl, (0, 2, 1))                            # (N, L, C) kernel layout
    y = run_wavenet_kernel(x_nlc, kparams, nb)
    jax.block_until_ready(y)

    np.testing.assert_allclose(np.asarray(y), np.asarray(y_ref), rtol=1e-3, atol=1e-3)
    print("KERNEL_OK")
</pallas_src>

<mosaic_0001>
module attributes {stable_mosaic.version = 11 : i64} {
  func.func @kernel(%arg0: i32, %arg1: memref<32x4xf32, #tpu.memory_space<vmem>>, %arg2: memref<4x32xf32, #tpu.memory_space<vmem>>, %arg3: memref<1x32xf32, #tpu.memory_space<vmem>>, %arg4: memref<2x32x32xf32, #tpu.memory_space<vmem>>, %arg5: memref<2x1x32xf32, #tpu.memory_space<vmem>>, %arg6: memref<2x1x32xf32, #tpu.memory_space<vmem>>, %arg7: memref<2x64x64xf32, #tpu.memory_space<vmem>>, %arg8: memref<2x1x64xf32, #tpu.memory_space<vmem>>, %arg9: memref<2x32x64xf32, #tpu.memory_space<vmem>>, %arg10: memref<2x1x64xf32, #tpu.memory_space<vmem>>, %arg11: memref<32x32xf32, #tpu.memory_space<vmem>>, %arg12: memref<1x32xf32, #tpu.memory_space<vmem>>, %arg13: memref<32x32xf32, #tpu.memory_space<vmem>>, %arg14: memref<1x32xf32, #tpu.memory_space<vmem>>, %arg15: memref<32x48xf32, #tpu.memory_space<vmem>>, %arg16: memref<32x48xf32, #tpu.memory_space<vmem>>, %arg17: memref<2x32xf32, #tpu.memory_space<vmem>>, %arg18: memref<48x128xf32, #tpu.memory_space<vmem>>, %arg19: memref<1x128xf32, #tpu.memory_space<vmem>>, %arg20: memref<1x2x128xf32, #tpu.memory_space<vmem>>) attributes {dimension_semantics = [#tpu.dimension_semantics<parallel>], iteration_bounds = array<i64: 1>, scalar_prefetch = 0 : i64, scratch_operands = 0 : i64, tpu.core_type = #tpu.core_type<tc>, window_params = [{transform_indices = @transform_0, window_bounds = array<i64: 32, 4>}, {pipeline_mode = #tpu.pipeline_mode<synchronous>, transform_indices = @transform_1, window_bounds = array<i64: 4, 32>}, {pipeline_mode = #tpu.pipeline_mode<synchronous>, transform_indices = @transform_2, window_bounds = array<i64: 1, 32>}, {pipeline_mode = #tpu.pipeline_mode<synchronous>, transform_indices = @transform_3, window_bounds = array<i64: 2, 32, 32>}, {pipeline_mode = #tpu.pipeline_mode<synchronous>, transform_indices = @transform_4, window_bounds = array<i64: 2, 1, 32>}, {pipeline_mode = #tpu.pipeline_mode<synchronous>, transform_indices = @transform_5, window_bounds = array<i64: 2, 1, 32>}, {pipeline_mode = #tpu.pipeline_mode<synchronous>, transform_indices = @transform_6, window_bounds = array<i64: 2, 64, 64>}, {pipeline_mode = #tpu.pipeline_mode<synchronous>, transform_indices = @transform_7, window_bounds = array<i64: 2, 1, 64>}, {pipeline_mode = #tpu.pipeline_mode<synchronous>, transform_indices = @transform_8, window_bounds = array<i64: 2, 32, 64>}, {pipeline_mode = #tpu.pipeline_mode<synchronous>, transform_indices = @transform_9, window_bounds = array<i64: 2, 1, 64>}, {pipeline_mode = #tpu.pipeline_mode<synchronous>, transform_indices = @transform_10, window_bounds = array<i64: 32, 32>}, {pipeline_mode = #tpu.pipeline_mode<synchronous>, transform_indices = @transform_11, window_bounds = array<i64: 1, 32>}, {pipeline_mode = #tpu.pipeline_mode<synchronous>, transform_indices = @transform_12, window_bounds = array<i64: 32, 32>}, {pipeline_mode = #tpu.pipeline_mode<synchronous>, transform_indices = @transform_13, window_bounds = array<i64: 1, 32>}, {pipeline_mode = #tpu.pipeline_mode<synchronous>, transform_indices = @transform_14, window_bounds = array<i64: 32, 48>}, {pipeline_mode = #tpu.pipeline_mode<synchronous>, transform_indices = @transform_15, window_bounds = array<i64: 32, 48>}, {pipeline_mode = #tpu.pipeline_mode<synchronous>, transform_indices = @transform_16, window_bounds = array<i64: 2, 32>}, {pipeline_mode = #tpu.pipeline_mode<synchronous>, transform_indices = @transform_17, window_bounds = array<i64: 48, 128>}, {pipeline_mode = #tpu.pipeline_mode<synchronous>, transform_indices = @transform_18, window_bounds = array<i64: 1, 128>}, {transform_indices = @transform_19, window_bounds = array<i64: 1, 2, 128>}]} {
    %c0 = arith.constant 0 : index
    %c0_0 = arith.constant 0 : index
    %0 = vector.load %arg1[%c0, %c0_0] : memref<32x4xf32, #tpu.memory_space<vmem>>, vector<32x4xf32>
    %c0_1 = arith.constant 0 : index
    %c0_2 = arith.constant 0 : index
    %1 = vector.load %arg2[%c0_1, %c0_2] : memref<4x32xf32, #tpu.memory_space<vmem>>, vector<4x32xf32>
    %cst = arith.constant dense<0.000000e+00> : vector<32x32xf32>
    %2 = tpu.matmul %0, %1, %cst {dimension_numbers = #tpu.dot_dimension_numbers<[1], [0], [0], [1], [0, 0, 1, 1], [], []>} : vector<32x4xf32>, vector<4x32xf32>, vector<32x32xf32> -> vector<32x32xf32>
    %c0_3 = arith.constant 0 : index
    %c0_4 = arith.constant 0 : index
    %3 = vector.load %arg3[%c0_3, %c0_4] : memref<1x32xf32, #tpu.memory_space<vmem>>, vector<1x32xf32>
    %4 = vector.broadcast %3 : vector<1x32xf32> to vector<32x32xf32>
    %5 = arith.addf %2, %4 : vector<32x32xf32>
    %cst_5 = arith.constant 0.000000e+00 : f32
    %6 = vector.broadcast %cst_5 : f32 to vector<32x32xf32>
    %c0_6 = arith.constant 0 : index
    %c0_7 = arith.constant 0 : index
    %c0_8 = arith.constant 0 : index
    %7 = vector.load %arg5[%c0_6, %c0_7, %c0_8] : memref<2x1x32xf32, #tpu.memory_space<vmem>>, vector<1x1x32xf32>
    %8 = vector.shape_cast %7 : vector<1x1x32xf32> to vector<1x32xf32>
    %9 = vector.broadcast %8 : vector<1x32xf32> to vector<32x32xf32>
    %10 = arith.mulf %5, %9 : vector<32x32xf32>
    %c0_9 = arith.constant 0 : index
    %c0_10 = arith.constant 0 : index
    %c0_11 = arith.constant 0 : index
    %11 = vector.load %arg6[%c0_9, %c0_10, %c0_11] : memref<2x1x32xf32, #tpu.memory_space<vmem>>, vector<1x1x32xf32>
    %12 = vector.shape_cast %11 : vector<1x1x32xf32> to vector<1x32xf32>
    %13 = vector.broadcast %12 : vector<1x32xf32> to vector<32x32xf32>
    %14 = arith.addf %10, %13 : vector<32x32xf32>
    %c0_12 = arith.constant 0 : index
    %c0_13 = arith.constant 0 : index
    %c0_14 = arith.constant 0 : index
    %15 = vector.load %arg4[%c0_12, %c0_13, %c0_14] : memref<2x32x32xf32, #tpu.memory_space<vmem>>, vector<1x32x32xf32>
    %16 = vector.shape_cast %15 : vector<1x32x32xf32> to vector<32x32xf32>
    %cst_15 = arith.constant dense<0.000000e+00> : vector<32x32xf32>
    %17 = tpu.matmul %16, %14, %cst_15 {dimension_numbers = #tpu.dot_dimension_numbers<[1], [0], [0], [1], [0, 0, 1, 1], [], []>} : vector<32x32xf32>, vector<32x32xf32>, vector<32x32xf32> -> vector<32x32xf32>
    %c0_16 = arith.constant 0 : index
    %c0_17 = arith.constant 0 : index
    %c0_18 = arith.constant 0 : index
    %18 = vector.load %arg7[%c0_16, %c0_17, %c0_18] : memref<2x64x64xf32, #tpu.memory_space<vmem>>, vector<1x64x64xf32>
    %19 = vector.shape_cast %18 : vector<1x64x64xf32> to vector<64x64xf32>
    %20 = vector.extract_strided_slice %19 {offsets = [0, 0], sizes = [32, 64], strides = [1, 1]} : vector<64x64xf32> to vector<32x64xf32>
    %cst_19 = arith.constant dense<0.000000e+00> : vector<32x64xf32>
    %21 = tpu.matmul %17, %20, %cst_19 {dimension_numbers = #tpu.dot_dimension_numbers<[1], [0], [0], [1], [0, 0, 1, 1], [], []>} : vector<32x32xf32>, vector<32x64xf32>, vector<32x64xf32> -> vector<32x64xf32>
    %22 = vector.extract_strided_slice %19 {offsets = [32, 0], sizes = [32, 64], strides = [1, 1]} : vector<64x64xf32> to vector<32x64xf32>
    %cst_20 = arith.constant dense<0.000000e+00> : vector<32x64xf32>
    %23 = tpu.matmul %14, %22, %cst_20 {dimension_numbers = #tpu.dot_dimension_numbers<[1], [0], [0], [1], [0, 0, 1, 1], [], []>} : vector<32x32xf32>, vector<32x64xf32>, vector<32x64xf32> -> vector<32x64xf32>
    %24 = arith.addf %21, %23 : vector<32x64xf32>
    %c0_21 = arith.constant 0 : index
    %c0_22 = arith.constant 0 : index
    %c0_23 = arith.constant 0 : index
    %25 = vector.load %arg8[%c0_21, %c0_22, %c0_23] : memref<2x1x64xf32, #tpu.memory_space<vmem>>, vector<1x1x64xf32>
    %26 = vector.shape_cast %25 : vector<1x1x64xf32> to vector<1x64xf32>
    %27 = vector.broadcast %26 : vector<1x64xf32> to vector<32x64xf32>
    %28 = arith.addf %24, %27 : vector<32x64xf32>
    %29 = vector.extract_strided_slice %28 {offsets = [0, 0], sizes = [32, 32], strides = [1, 1]} : vector<32x64xf32> to vector<32x32xf32>
    %30 = math.tanh %29 : vector<32x32xf32>
    %31 = vector.extract_strided_slice %28 {offsets = [0, 32], sizes = [32, 32], strides = [1, 1]} : vector<32x64xf32> to vector<32x32xf32>
    %32 = arith.negf %31 : vector<32x32xf32>
    %33 = math.exp %32 : vector<32x32xf32>
    %cst_24 = arith.constant 1.000000e+00 : f32
    %34 = vector.broadcast %cst_24 : f32 to vector<32x32xf32>
    %35 = arith.addf %34, %33 : vector<32x32xf32>
    %36 = arith.divf %34, %35 : vector<32x32xf32>
    %37 = arith.mulf %30, %36 : vector<32x32xf32>
    %c0_25 = arith.constant 0 : index
    %c0_26 = arith.constant 0 : index
    %c0_27 = arith.constant 0 : index
    %38 = vector.load %arg9[%c0_25, %c0_26, %c0_27] : memref<2x32x64xf32, #tpu.memory_space<vmem>>, vector<1x32x64xf32>
    %39 = vector.shape_cast %38 : vector<1x32x64xf32> to vector<32x64xf32>
    %cst_28 = arith.constant dense<0.000000e+00> : vector<32x64xf32>
    %40 = tpu.matmul %37, %39, %cst_28 {dimension_numbers = #tpu.dot_dimension_numbers<[1], [0], [0], [1], [0, 0, 1, 1], [], []>} : vector<32x32xf32>, vector<32x64xf32>, vector<32x64xf32> -> vector<32x64xf32>
    %c0_29 = arith.constant 0 : index
    %c0_30 = arith.constant 0 : index
    %c0_31 = arith.constant 0 : index
    %41 = vector.load %arg10[%c0_29, %c0_30, %c0_31] : memref<2x1x64xf32, #tpu.memory_space<vmem>>, vector<1x1x64xf32>
    %42 = vector.shape_cast %41 : vector<1x1x64xf32> to vector<1x64xf32>
    %43 = vector.broadcast %42 : vector<1x64xf32> to vector<32x64xf32>
    %44 = arith.addf %40, %43 : vector<32x64xf32>
    %45 = vector.extract_strided_slice %44 {offsets = [0, 0], sizes = [32, 32], strides = [1, 1]} : vector<32x64xf32> to vector<32x32xf32>
    %46 = arith.addf %45, %14 : vector<32x32xf32>
    %47 = vector.extract_strided_slice %44 {offsets = [0, 32], sizes = [32, 32], strides = [1, 1]} : vector<32x64xf32> to vector<32x32xf32>
    %48 = arith.addf %6, %47 : vector<32x32xf32>
    %c1 = arith.constant 1 : index
    %c0_32 = arith.constant 0 : index
    %c0_33 = arith.constant 0 : index
    %49 = vector.load %arg5[%c1, %c0_32, %c0_33] : memref<2x1x32xf32, #tpu.memory_space<vmem>>, vector<1x1x32xf32>
    %50 = vector.shape_cast %49 : vector<1x1x32xf32> to vector<1x32xf32>
    %51 = vector.broadcast %50 : vector<1x32xf32> to vector<32x32xf32>
    %52 = arith.mulf %46, %51 : vector<32x32xf32>
    %c1_34 = arith.constant 1 : index
    %c0_35 = arith.constant 0 : index
    %c0_36 = arith.constant 0 : index
    %53 = vector.load %arg6[%c1_34, %c0_35, %c0_36] : memref<2x1x32xf32, #tpu.memory_space<vmem>>, vector<1x1x32xf32>
    %54 = vector.shape_cast %53 : vector<1x1x32xf32> to vector<1x32xf32>
    %55 = vector.broadcast %54 : vector<1x32xf32> to vector<32x32xf32>
    %56 = arith.addf %52, %55 : vector<32x32xf32>
    %c1_37 = arith.constant 1 : index
    %c0_38 = arith.constant 0 : index
    %c0_39 = arith.constant 0 : index
    %57 = vector.load %arg4[%c1_37, %c0_38, %c0_39] : memref<2x32x32xf32, #tpu.memory_space<vmem>>, vector<1x32x32xf32>
    %58 = vector.shape_cast %57 : vector<1x32x32xf32> to vector<32x32xf32>
    %cst_40 = arith.constant dense<0.000000e+00> : vector<32x32xf32>
    %59 = tpu.matmul %58, %56, %cst_40 {dimension_numbers = #tpu.dot_dimension_numbers<[1], [0], [0], [1], [0, 0, 1, 1], [], []>} : vector<32x32xf32>, vector<32x32xf32>, vector<32x32xf32> -> vector<32x32xf32>
    %c1_41 = arith.constant 1 : index
    %c0_42 = arith.constant 0 : index
    %c0_43 = arith.constant 0 : index
    %60 = vector.load %arg7[%c1_41, %c0_42, %c0_43] : memref<2x64x64xf32, #tpu.memory_space<vmem>>, vector<1x64x64xf32>
    %61 = vector.shape_cast %60 : vector<1x64x64xf32> to vector<64x64xf32>
    %62 = vector.extract_strided_slice %61 {offsets = [0, 0], sizes = [32, 64], strides = [1, 1]} : vector<64x64xf32> to vector<32x64xf32>
    %cst_44 = arith.constant dense<0.000000e+00> : vector<32x64xf32>
    %63 = tpu.matmul %59, %62, %cst_44 {dimension_numbers = #tpu.dot_dimension_numbers<[1], [0], [0], [1], [0, 0, 1, 1], [], []>} : vector<32x32xf32>, vector<32x64xf32>, vector<32x64xf32> -> vector<32x64xf32>
    %64 = vector.extract_strided_slice %61 {offsets = [32, 0], sizes = [32, 64], strides = [1, 1]} : vector<64x64xf32> to vector<32x64xf32>
    %cst_45 = arith.constant dense<0.000000e+00> : vector<32x64xf32>
    %65 = tpu.matmul %56, %64, %cst_45 {dimension_numbers = #tpu.dot_dimension_numbers<[1], [0], [0], [1], [0, 0, 1, 1], [], []>} : vector<32x32xf32>, vector<32x64xf32>, vector<32x64xf32> -> vector<32x64xf32>
    %66 = arith.addf %63, %65 : vector<32x64xf32>
    %c1_46 = arith.constant 1 : index
    %c0_47 = arith.constant 0 : index
    %c0_48 = arith.constant 0 : index
    %67 = vector.load %arg8[%c1_46, %c0_47, %c0_48] : memref<2x1x64xf32, #tpu.memory_space<vmem>>, vector<1x1x64xf32>
    %68 = vector.shape_cast %67 : vector<1x1x64xf32> to vector<1x64xf32>
    %69 = vector.broadcast %68 : vector<1x64xf32> to vector<32x64xf32>
    %70 = arith.addf %66, %69 : vector<32x64xf32>
    %71 = vector.extract_strided_slice %70 {offsets = [0, 0], sizes = [32, 32], strides = [1, 1]} : vector<32x64xf32> to vector<32x32xf32>
    %72 = math.tanh %71 : vector<32x32xf32>
    %73 = vector.extract_strided_slice %70 {offsets = [0, 32], sizes = [32, 32], strides = [1, 1]} : vector<32x64xf32> to vector<32x32xf32>
    %74 = arith.negf %73 : vector<32x32xf32>
    %75 = math.exp %74 : vector<32x32xf32>
    %cst_49 = arith.constant 1.000000e+00 : f32
    %76 = vector.broadcast %cst_49 : f32 to vector<32x32xf32>
    %77 = arith.addf %76, %75 : vector<32x32xf32>
    %78 = arith.divf %76, %77 : vector<32x32xf32>
    %79 = arith.mulf %72, %78 : vector<32x32xf32>
    %c1_50 = arith.constant 1 : index
    %c0_51 = arith.constant 0 : index
    %c0_52 = arith.constant 0 : index
    %80 = vector.load %arg9[%c1_50, %c0_51, %c0_52] : memref<2x32x64xf32, #tpu.memory_space<vmem>>, vector<1x32x64xf32>
    %81 = vector.shape_cast %80 : vector<1x32x64xf32> to vector<32x64xf32>
    %cst_53 = arith.constant dense<0.000000e+00> : vector<32x64xf32>
    %82 = tpu.matmul %79, %81, %cst_53 {dimension_numbers = #tpu.dot_dimension_numbers<[1], [0], [0], [1], [0, 0, 1, 1], [], []>} : vector<32x32xf32>, vector<32x64xf32>, vector<32x64xf32> -> vector<32x64xf32>
    %c1_54 = arith.constant 1 : index
    %c0_55 = arith.constant 0 : index
    %c0_56 = arith.constant 0 : index
    %83 = vector.load %arg10[%c1_54, %c0_55, %c0_56] : memref<2x1x64xf32, #tpu.memory_space<vmem>>, vector<1x1x64xf32>
    %84 = vector.shape_cast %83 : vector<1x1x64xf32> to vector<1x64xf32>
    %85 = vector.broadcast %84 : vector<1x64xf32> to vector<32x64xf32>
    %86 = arith.addf %82, %85 : vector<32x64xf32>
    %87 = vector.extract_strided_slice %86 {offsets = [0, 32], sizes = [32, 32], strides = [1, 1]} : vector<32x64xf32> to vector<32x32xf32>
    %88 = arith.addf %48, %87 : vector<32x32xf32>
    %cst_57 = arith.constant 0.000000e+00 : f32
    %89 = vector.broadcast %cst_57 : f32 to vector<32x32xf32>
    %90 = arith.maximumf %88, %89 : vector<32x32xf32>
    %c0_58 = arith.constant 0 : index
    %c0_59 = arith.constant 0 : index
    %91 = vector.load %arg11[%c0_58, %c0_59] : memref<32x32xf32, #tpu.memory_space<vmem>>, vector<32x32xf32>
    %cst_60 = arith.constant dense<0.000000e+00> : vector<32x32xf32>
    %92 = tpu.matmul %90, %91, %cst_60 {dimension_numbers = #tpu.dot_dimension_numbers<[1], [0], [0], [1], [0, 0, 1, 1], [], []>} : vector<32x32xf32>, vector<32x32xf32>, vector<32x32xf32> -> vector<32x32xf32>
    %c0_61 = arith.constant 0 : index
    %c0_62 = arith.constant 0 : index
    %93 = vector.load %arg12[%c0_61, %c0_62] : memref<1x32xf32, #tpu.memory_space<vmem>>, vector<1x32xf32>
    %94 = vector.broadcast %93 : vector<1x32xf32> to vector<32x32xf32>
    %95 = arith.addf %92, %94 : vector<32x32xf32>
    %cst_63 = arith.constant 0.000000e+00 : f32
    %96 = vector.broadcast %cst_63 : f32 to vector<32x32xf32>
    %97 = arith.maximumf %95, %96 : vector<32x32xf32>
    %c0_64 = arith.constant 0 : index
    %c0_65 = arith.constant 0 : index
    %98 = vector.load %arg13[%c0_64, %c0_65] : memref<32x32xf32, #tpu.memory_space<vmem>>, vector<32x32xf32>
    %cst_66 = arith.constant dense<0.000000e+00> : vector<32x32xf32>
    %99 = tpu.matmul %97, %98, %cst_66 {dimension_numbers = #tpu.dot_dimension_numbers<[1], [0], [0], [1], [0, 0, 1, 1], [], []>} : vector<32x32xf32>, vector<32x32xf32>, vector<32x32xf32> -> vector<32x32xf32>
    %c0_67 = arith.constant 0 : index
    %c0_68 = arith.constant 0 : index
    %100 = vector.load %arg14[%c0_67, %c0_68] : memref<1x32xf32, #tpu.memory_space<vmem>>, vector<1x32xf32>
    %101 = vector.broadcast %100 : vector<1x32xf32> to vector<32x32xf32>
    %102 = arith.addf %99, %101 : vector<32x32xf32>
    %c0_69 = arith.constant 0 : index
    %c0_70 = arith.constant 0 : index
    %103 = vector.load %arg15[%c0_69, %c0_70] : memref<32x48xf32, #tpu.memory_space<vmem>>, vector<32x48xf32>
    %cst_71 = arith.constant dense<0.000000e+00> : vector<32x48xf32>
    %104 = tpu.matmul %102, %103, %cst_71 {dimension_numbers = #tpu.dot_dimension_numbers<[1], [0], [0], [1], [0, 0, 1, 1], [], []>} : vector<32x32xf32>, vector<32x48xf32>, vector<32x48xf32> -> vector<32x48xf32>
    %c0_72 = arith.constant 0 : index
    %c0_73 = arith.constant 0 : index
    %105 = vector.load %arg16[%c0_72, %c0_73] : memref<32x48xf32, #tpu.memory_space<vmem>>, vector<32x48xf32>
    %106 = arith.mulf %104, %105 : vector<32x48xf32>
    %c0_74 = arith.constant 0 : index
    %c0_75 = arith.constant 0 : index
    %107 = vector.load %arg18[%c0_74, %c0_75] : memref<48x128xf32, #tpu.memory_space<vmem>>, vector<48x128xf32>
    %cst_76 = arith.constant dense<0.000000e+00> : vector<32x128xf32>
    %108 = tpu.matmul %106, %107, %cst_76 {dimension_numbers = #tpu.dot_dimension_numbers<[1], [0], [0], [1], [0, 0, 1, 1], [], []>} : vector<32x48xf32>, vector<48x128xf32>, vector<32x128xf32> -> vector<32x128xf32>
    %c0_77 = arith.constant 0 : index
    %c0_78 = arith.constant 0 : index
    %109 = vector.load %arg17[%c0_77, %c0_78] : memref<2x32xf32, #tpu.memory_space<vmem>>, vector<2x32xf32>
    %cst_79 = arith.constant dense<0.000000e+00> : vector<2x128xf32>
    %110 = tpu.matmul %109, %108, %cst_79 {dimension_numbers = #tpu.dot_dimension_numbers<[1], [0], [0], [1], [0, 0, 1, 1], [], []>} : vector<2x32xf32>, vector<32x128xf32>, vector<2x128xf32> -> vector<2x128xf32>
    %c0_80 = arith.constant 0 : index
    %c0_81 = arith.constant 0 : index
    %111 = vector.load %arg19[%c0_80, %c0_81] : memref<1x128xf32, #tpu.memory_space<vmem>>, vector<1x128xf32>
    %112 = vector.broadcast %111 : vector<1x128xf32> to vector<2x128xf32>
    %113 = arith.addf %110, %112 : vector<2x128xf32>
    %c0_82 = arith.constant 0 : index
    %c0_83 = arith.constant 0 : index
    %c0_84 = arith.constant 0 : index
    %114 = vector.load %arg20[%c0_82, %c0_83, %c0_84] : memref<1x2x128xf32, #tpu.memory_space<vmem>>, vector<1x2x128xf32>
    %115 = vector.shape_cast %114 : vector<1x2x128xf32> to vector<2x128xf32>
    %116 = vector.shape_cast %113 : vector<2x128xf32> to vector<1x2x128xf32>
    tpu.vector_store %arg20[%c0_82, %c0_83, %c0_84], %116 {strides = array<i32>} : memref<1x2x128xf32, #tpu.memory_space<vmem>>, vector<1x2x128xf32>,
    return
  }
  func.func @transform_0(%arg0: i32) -> (i32, i32) {
    %c0_i32 = arith.constant 0 : i32
    %c0_i32_0 = arith.constant 0 : i32
    return %arg0, %c0_i32 : i32, i32
  }
  func.func @transform_1(%arg0: i32) -> (i32, i32) {
    %c0_i32 = arith.constant 0 : i32
    %c0_i32_0 = arith.constant 0 : i32
    %c0_i32_1 = arith.constant 0 : i32
    return %c0_i32, %c0_i32_0 : i32, i32
  }
  func.func @transform_2(%arg0: i32) -> (i32, i32) {
    %c0_i32 = arith.constant 0 : i32
    %c0_i32_0 = arith.constant 0 : i32
    %c0_i32_1 = arith.constant 0 : i32
    return %c0_i32, %c0_i32_0 : i32, i32
  }
  func.func @transform_3(%arg0: i32) -> (i32, i32, i32) {
    %c0_i32 = arith.constant 0 : i32
    %c0_i32_0 = arith.constant 0 : i32
    %c0_i32_1 = arith.constant 0 : i32
    %c0_i32_2 = arith.constant 0 : i32
    return %c0_i32, %c0_i32_0, %c0_i32_1 : i32, i32, i32
  }
  func.func @transform_4(%arg0: i32) -> (i32, i32, i32) {
    %c0_i32 = arith.constant 0 : i32
    %c0_i32_0 = arith.constant 0 : i32
    %c0_i32_1 = arith.constant 0 : i32
    %c0_i32_2 = arith.constant 0 : i32
    return %c0_i32, %c0_i32_0, %c0_i32_1 : i32, i32, i32
  }
  func.func @transform_5(%arg0: i32) -> (i32, i32, i32) {
    %c0_i32 = arith.constant 0 : i32
    %c0_i32_0 = arith.constant 0 : i32
    %c0_i32_1 = arith.constant 0 : i32
    %c0_i32_2 = arith.constant 0 : i32
    return %c0_i32, %c0_i32_0, %c0_i32_1 : i32, i32, i32
  }
  func.func @transform_6(%arg0: i32) -> (i32, i32, i32) {
    %c0_i32 = arith.constant 0 : i32
    %c0_i32_0 = arith.constant 0 : i32
    %c0_i32_1 = arith.constant 0 : i32
    %c0_i32_2 = arith.constant 0 : i32
    return %c0_i32, %c0_i32_0, %c0_i32_1 : i32, i32, i32
  }
  func.func @transform_7(%arg0: i32) -> (i32, i32, i32) {
    %c0_i32 = arith.constant 0 : i32
    %c0_i32_0 = arith.constant 0 : i32
    %c0_i32_1 = arith.constant 0 : i32
    %c0_i32_2 = arith.constant 0 : i32
    return %c0_i32, %c0_i32_0, %c0_i32_1 : i32, i32, i32
  }
  func.func @transform_8(%arg0: i32) -> (i32, i32, i32) {
    %c0_i32 = arith.constant 0 : i32
    %c0_i32_0 = arith.constant 0 : i32
    %c0_i32_1 = arith.constant 0 : i32
    %c0_i32_2 = arith.constant 0 : i32
    return %c0_i32, %c0_i32_0, %c0_i32_1 : i32, i32, i32
  }
  func.func @transform_9(%arg0: i32) -> (i32, i32, i32) {
    %c0_i32 = arith.constant 0 : i32
    %c0_i32_0 = arith.constant 0 : i32
    %c0_i32_1 = arith.constant 0 : i32
    %c0_i32_2 = arith.constant 0 : i32
    return %c0_i32, %c0_i32_0, %c0_i32_1 : i32, i32, i32
  }
  func.func @transform_10(%arg0: i32) -> (i32, i32) {
    %c0_i32 = arith.constant 0 : i32
    %c0_i32_0 = arith.constant 0 : i32
    %c0_i32_1 = arith.constant 0 : i32
    return %c0_i32, %c0_i32_0 : i32, i32
  }
  func.func @transform_11(%arg0: i32) -> (i32, i32) {
    %c0_i32 = arith.constant 0 : i32
    %c0_i32_0 = arith.constant 0 : i32
    %c0_i32_1 = arith.constant 0 : i32
    return %c0_i32, %c0_i32_0 : i32, i32
  }
  func.func @transform_12(%arg0: i32) -> (i32, i32) {
    %c0_i32 = arith.constant 0 : i32
    %c0_i32_0 = arith.constant 0 : i32
    %c0_i32_1 = arith.constant 0 : i32
    return %c0_i32, %c0_i32_0 : i32, i32
  }
  func.func @transform_13(%arg0: i32) -> (i32, i32) {
    %c0_i32 = arith.constant 0 : i32
    %c0_i32_0 = arith.constant 0 : i32
    %c0_i32_1 = arith.constant 0 : i32
    return %c0_i32, %c0_i32_0 : i32, i32
  }
  func.func @transform_14(%arg0: i32) -> (i32, i32) {
    %c0_i32 = arith.constant 0 : i32
    %c0_i32_0 = arith.constant 0 : i32
    %c0_i32_1 = arith.constant 0 : i32
    return %c0_i32, %c0_i32_0 : i32, i32
  }
  func.func @transform_15(%arg0: i32) -> (i32, i32) {
    %c0_i32 = arith.constant 0 : i32
    %c0_i32_0 = arith.constant 0 : i32
    %c0_i32_1 = arith.constant 0 : i32
    return %c0_i32, %c0_i32_0 : i32, i32
  }
  func.func @transform_16(%arg0: i32) -> (i32, i32) {
    %c0_i32 = arith.constant 0 : i32
    %c0_i32_0 = arith.constant 0 : i32
    %c0_i32_1 = arith.constant 0 : i32
    return %c0_i32, %c0_i32_0 : i32, i32
  }
  func.func @transform_17(%arg0: i32) -> (i32, i32) {
    %c0_i32 = arith.constant 0 : i32
    %c0_i32_0 = arith.constant 0 : i32
    %c0_i32_1 = arith.constant 0 : i32
    return %c0_i32, %c0_i32_0 : i32, i32
  }
  func.func @transform_18(%arg0: i32) -> (i32, i32) {
    %c0_i32 = arith.constant 0 : i32
    %c0_i32_0 = arith.constant 0 : i32
    %c0_i32_1 = arith.constant 0 : i32
    return %c0_i32, %c0_i32_0 : i32, i32
  }
  func.func @transform_19(%arg0: i32) -> (i32, i32, i32) {
    %c0_i32 = arith.constant 0 : i32
    %c0_i32_0 = arith.constant 0 : i32
    %c0_i32_1 = arith.constant 0 : i32
    return %arg0, %c0_i32, %c0_i32_0 : i32, i32, i32
  }
}

</mosaic_0001>

<llo_original>
// kernel: tpu_custom_call.1
$region0: #{tpu_custom_call.1}
  #allocation0 [shape = 'u32[]', space=smem, size = 0x4, offset = 0x4, fixed_abs, tag = 'smem constant byte address 0x4 - core index']
  #allocation1 [shape = 'u32[144,128]{1,0:T(1,128)}', space=vmem, size = 0x12000, scoped, tag = 'internal scratch']
  %s0 = inlined_call_operand.vmem [shape: f32[32,4], index: 0, kind: input, shape index: {}]
  %s1 = inlined_call_operand.hbm [shape: f32[4,32], index: 1, kind: input, shape index: {}]
  %s2 = inlined_call_operand.hbm [shape: f32[1,32], index: 2, kind: input, shape index: {}]
  %s3 = inlined_call_operand.hbm [shape: f32[2,32,32], index: 3, kind: input, shape index: {}]
  %s4 = inlined_call_operand.vmem [shape: f32[2,1,32], index: 4, kind: input, shape index: {}]
  %s5 = inlined_call_operand.hbm [shape: f32[2,1,32], index: 5, kind: input, shape index: {}]
  %s6 = inlined_call_operand.hbm [shape: f32[2,64,64], index: 6, kind: input, shape index: {}]
  %s7 = inlined_call_operand.hbm [shape: f32[2,1,64], index: 7, kind: input, shape index: {}]
  %s8 = inlined_call_operand.vmem [shape: f32[2,32,64], index: 8, kind: input, shape index: {}]
  %s9 = inlined_call_operand.vmem [shape: f32[2,1,64], index: 9, kind: input, shape index: {}]
  %s10 = inlined_call_operand.hbm [shape: f32[32,32], index: 10, kind: input, shape index: {}]
  %s11 = inlined_call_operand.vmem [shape: f32[1,32], index: 11, kind: input, shape index: {}]
  %s12 = inlined_call_operand.hbm [shape: f32[32,32], index: 12, kind: input, shape index: {}]
  %s13 = inlined_call_operand.vmem [shape: f32[1,32], index: 13, kind: input, shape index: {}]
  %s14 = inlined_call_operand.hbm [shape: f32[32,48], index: 14, kind: input, shape index: {}]
  %s15 = inlined_call_operand.hbm [shape: f32[32,48], index: 15, kind: input, shape index: {}]
  %s16 = inlined_call_operand.vmem [shape: f32[2,32], index: 16, kind: input, shape index: {}]
  %s17 = inlined_call_operand.hbm [shape: f32[48,128], index: 17, kind: input, shape index: {}]
  %s18 = inlined_call_operand.vmem [shape: f32[1,128], index: 18, kind: input, shape index: {}]
  %s19 = inlined_call_operand.hbm [shape: f32[1,2,128], index: 19, kind: output, shape index: {}]
  %s20 = sld [smem:[#allocation0]]
  $region130: #{tpu_custom_call.1} parent=0
    _
  %s22 = ssub.s32 1, %s20
  %s23 = scalar_select 0, %s22, %s20
  $region1: #{tpu_custom_call.1} parent=0
    #allocation2 [shape = 'u8[2048]{0}', space=vmem, size = 0x800, scoped, tag = 'input window, operand 1, single buffered']
    #allocation3 [shape = 's32[1]{0}', space=sflag, size = 0x4, scoped, tag = 'scoped memory for tpu_custom_call.1']
    #allocation4 [shape = 's32[1]{0}', space=sflag, size = 0x4, scoped, tag = 'scoped memory for tpu_custom_call.1']
    #allocation5 [shape = 'u8[512]{0}', space=vmem, size = 0x400, scoped, tag = 'input window, operand 2, single buffered']
    #allocation6 [shape = 's32[1]{0}', space=sflag, size = 0x4, scoped, tag = 'scoped memory for tpu_custom_call.1']
    #allocation7 [shape = 'u8[32768]{0}', space=vmem, size = 0x8000, scoped, tag = 'input window, operand 3, single buffered']
    #allocation8 [shape = 'u8[1024]{0}', space=vmem, size = 0x400, scoped, tag = 'input window, operand 5, single buffered']
    #allocation9 [shape = 's32[1]{0}', space=sflag, size = 0x4, scoped, tag = 'scoped memory for tpu_custom_call.1']
    #allocation10 [shape = 'u8[65536]{0}', space=vmem, size = 0x10000, scoped, tag = 'input window, operand 6, single buffered']
    #allocation11 [shape = 'u8[1024]{0}', space=vmem, size = 0x400, scoped, tag = 'input window, operand 7, single buffered']
    #allocation12 [shape = 's32[1]{0}', space=sflag, size = 0x4, scoped, tag = 'scoped memory for tpu_custom_call.1']
    #allocation13 [shape = 'u8[16384]{0}', space=vmem, size = 0x4000, scoped, tag = 'input window, operand 10, single buffered']
    #allocation14 [shape = 'u8[16384]{0}', space=vmem, size = 0x4000, scoped, tag = 'input window, operand 12, single buffered']
    #allocation15 [shape = 's32[1]{0}', space=sflag, size = 0x4, scoped, tag = 'scoped memory for tpu_custom_call.1']
    #allocation16 [shape = 'u8[16384]{0}', space=vmem, size = 0x4000, scoped, tag = 'input window, operand 14, single buffered']
    #allocation17 [shape = 'u8[16384]{0}', space=vmem, size = 0x4000, scoped, tag = 'input window, operand 15, single buffered']
    #allocation18 [shape = 's32[1]{0}', space=sflag, size = 0x4, scoped, tag = 'scoped memory for tpu_custom_call.1']
    #allocation19 [shape = 'u8[24576]{0}', space=vmem, size = 0x6000, scoped, tag = 'input window, operand 17, single buffered']
    #allocation20 [shape = 'u8[1024]{0}', space=vmem, size = 0x400, scoped, tag = 'output window, operand 0, single buffered']
    %24 = vsyncpa [#allocation3], 0
    %25 = vsyncpa [#allocation6], 0
    %26 = vsyncpa [#allocation9], 0
    %27 = vsyncpa [#allocation12], 0
    %28 = vsyncpa [#allocation15], 0
    %29 = vsyncpa [#allocation18], 0
    %30 = vsyncpa [#allocation4], 0
    // Predicated region
    $region2: #{tpu_custom_call.1} parent=1 // pred_check
      _
    $region3: #{tpu_custom_call.1} parent=1 // pred_check_branch
      %32 = sbr.rel (0) target = $region5
    $region4: #{tpu_custom_call.1} parent=1 // pred_region
      _
    $region5: #{tpu_custom_call.1} parent=1 // pred_fallthru
      _
    // Predicated region
    $region6: #{tpu_custom_call.1} parent=1 // pred_check
      _
    $region7: #{tpu_custom_call.1} parent=1 // pred_check_branch
      %34 = sbr.rel (0) target = $region9
    $region8: #{tpu_custom_call.1} parent=1 // pred_region
      %s36 = ssub.s32 64, 64
      %37 = vsyncadd [#allocation3], %s36
      %s39 = sshll.u32 [#allocation2], 4
      %s40 = int_to_ptr.vmem [resolvable:$true] %s39
      %42 = dma.hbm_to_vmem [thread:$0]  %s1, 64, %s40, [#allocation3]
    $region9: #{tpu_custom_call.1} parent=1 // pred_fallthru
      _
    // Predicated region
    $region10: #{tpu_custom_call.1} parent=1 // pred_check
      _
    $region11: #{tpu_custom_call.1} parent=1 // pred_check_branch
      %44 = sbr.rel (0) target = $region13
    $region12: #{tpu_custom_call.1} parent=1 // pred_region
      %s46 = ssub.s32 16, 16
      %47 = vsyncadd [#allocation6], %s46
      %s49 = sshll.u32 [#allocation5], 4
      %s50 = int_to_ptr.vmem [resolvable:$true] %s49
      %52 = dma.hbm_to_vmem [thread:$0]  %s2, 16, %s50, [#allocation6]
    $region13: #{tpu_custom_call.1} parent=1 // pred_fallthru
      _
    // Predicated region
    $region14: #{tpu_custom_call.1} parent=1 // pred_check
      _
    $region15: #{tpu_custom_call.1} parent=1 // pred_check_branch
      %54 = sbr.rel (0) target = $region17
    $region16: #{tpu_custom_call.1} parent=1 // pred_region
      %s56 = ssub.s32 1024, 1024
      %57 = vsyncadd [#allocation6], %s56
      %s58 = sshll.u32 [#allocation7], 4
      %s59 = int_to_ptr.vmem [resolvable:$true] %s58
      %64 = dma.hbm_to_vmem [thread:$0]  %s3, 1024, %s59, [#allocation6], 128, 128, 8
    $region17: #{tpu_custom_call.1} parent=1 // pred_fallthru
      _
    // Predicated region
    $region18: #{tpu_custom_call.1} parent=1 // pred_check
      _
    $region19: #{tpu_custom_call.1} parent=1 // pred_check_branch
      %66 = sbr.rel (0) target = $region21
    $region20: #{tpu_custom_call.1} parent=1 // pred_region
      _
    $region21: #{tpu_custom_call.1} parent=1 // pred_fallthru
      _
    // Predicated region
    $region22: #{tpu_custom_call.1} parent=1 // pred_check
      _
    $region23: #{tpu_custom_call.1} parent=1 // pred_check_branch
      %68 = sbr.rel (0) target = $region25
    $region24: #{tpu_custom_call.1} parent=1 // pred_region
      %s70 = ssub.s32 32, 32
      %71 = vsyncadd [#allocation9], %s70
      %s72 = sshll.u32 [#allocation8], 4
      %s73 = int_to_ptr.vmem [resolvable:$true] %s72
      %78 = dma.hbm_to_vmem [thread:$0]  %s5, 32, %s73, [#allocation9], 16, 16, 1
    $region25: #{tpu_custom_call.1} parent=1 // pred_fallthru
      _
    // Predicated region
    $region26: #{tpu_custom_call.1} parent=1 // pred_check
      _
    $region27: #{tpu_custom_call.1} parent=1 // pred_check_branch
      %80 = sbr.rel (0) target = $region29
    $region28: #{tpu_custom_call.1} parent=1 // pred_region
      %s82 = ssub.s32 2048, 2048
      %83 = vsyncadd [#allocation9], %s82
      %s84 = sshll.u32 [#allocation10], 4
      %s85 = int_to_ptr.vmem [resolvable:$true] %s84
      %90 = dma.hbm_to_vmem [thread:$0]  %s6, 2048, %s85, [#allocation9], 128, 128, 8
    $region29: #{tpu_custom_call.1} parent=1 // pred_fallthru
      _
    // Predicated region
    $region30: #{tpu_custom_call.1} parent=1 // pred_check
      _
    $region31: #{tpu_custom_call.1} parent=1 // pred_check_branch
      %92 = sbr.rel (0) target = $region33
    $region32: #{tpu_custom_call.1} parent=1 // pred_region
      %s94 = ssub.s32 32, 32
      %95 = vsyncadd [#allocation12], %s94
      %s96 = sshll.u32 [#allocation11], 4
      %s97 = int_to_ptr.vmem [resolvable:$true] %s96
      %102 = dma.hbm_to_vmem [thread:$0]  %s7, 32, %s97, [#allocation12], 16, 16, 1
    $region33: #{tpu_custom_call.1} parent=1 // pred_fallthru
      _
    // Predicated region
    $region34: #{tpu_custom_call.1} parent=1 // pred_check
      _
    $region35: #{tpu_custom_call.1} parent=1 // pred_check_branch
      %104 = sbr.rel (0) target = $region37
    $region36: #{tpu_custom_call.1} parent=1 // pred_region
      _
    $region37: #{tpu_custom_call.1} parent=1 // pred_fallthru
      _
    // Predicated region
    $region38: #{tpu_custom_call.1} parent=1 // pred_check
      _
    $region39: #{tpu_custom_call.1} parent=1 // pred_check_branch
      %106 = sbr.rel (0) target = $region41
    $region40: #{tpu_custom_call.1} parent=1 // pred_region
      _
    $region41: #{tpu_custom_call.1} parent=1 // pred_fallthru
      _
    // Predicated region
    $region42: #{tpu_custom_call.1} parent=1 // pred_check
      _
    $region43: #{tpu_custom_call.1} parent=1 // pred_check_branch
      %108 = sbr.rel (0) target = $region45
    $region44: #{tpu_custom_call.1} parent=1 // pred_region
      %s110 = ssub.s32 512, 512
      %111 = vsyncadd [#allocation12], %s110
      %s112 = sshll.u32 [#allocation13], 4
      %s113 = int_to_ptr.vmem [resolvable:$true] %s112
      %118 = dma.hbm_to_vmem [thread:$0]  %s10, 512, %s113, [#allocation12], 128, 128, 8
    $region45: #{tpu_custom_call.1} parent=1 // pred_fallthru
      _
    // Predicated region
    $region46: #{tpu_custom_call.1} parent=1 // pred_check
      _
    $region47: #{tpu_custom_call.1} parent=1 // pred_check_branch
      %120 = sbr.rel (0) target = $region49
    $region48: #{tpu_custom_call.1} parent=1 // pred_region
      _
    $region49: #{tpu_custom_call.1} parent=1 // pred_fallthru
      _
    // Predicated region
    $region50: #{tpu_custom_call.1} parent=1 // pred_check
      _
    $region51: #{tpu_custom_call.1} parent=1 // pred_check_branch
      %122 = sbr.rel (0) target = $region53
    $region52: #{tpu_custom_call.1} parent=1 // pred_region
      %s124 = ssub.s32 512, 512
      %125 = vsyncadd [#allocation15], %s124
      %s126 = sshll.u32 [#allocation14], 4
      %s127 = int_to_ptr.vmem [resolvable:$true] %s126
      %132 = dma.hbm_to_vmem [thread:$0]  %s12, 512, %s127, [#allocation15], 128, 128, 8
    $region53: #{tpu_custom_call.1} parent=1 // pred_fallthru
      _
    // Predicated region
    $region54: #{tpu_custom_call.1} parent=1 // pred_check
      _
    $region55: #{tpu_custom_call.1} parent=1 // pred_check_branch
      %134 = sbr.rel (0) target = $region57
    $region56: #{tpu_custom_call.1} parent=1 // pred_region
      _
    $region57: #{tpu_custom_call.1} parent=1 // pred_fallthru
      _
    // Predicated region
    $region58: #{tpu_custom_call.1} parent=1 // pred_check
      _
    $region59: #{tpu_custom_call.1} parent=1 // pred_check_branch
      %136 = sbr.rel (0) target = $region61
    $region60: #{tpu_custom_call.1} parent=1 // pred_region
      %s138 = ssub.s32 512, 512
      %139 = vsyncadd [#allocation15], %s138
      %s140 = sshll.u32 [#allocation16], 4
      %s141 = int_to_ptr.vmem [resolvable:$true] %s140
      %146 = dma.hbm_to_vmem [thread:$0]  %s14, 512, %s141, [#allocation15], 128, 128, 8
    $region61: #{tpu_custom_call.1} parent=1 // pred_fallthru
      _
    // Predicated region
    $region62: #{tpu_custom_call.1} parent=1 // pred_check
      _
    $region63: #{tpu_custom_call.1} parent=1 // pred_check_branch
      %148 = sbr.rel (0) target = $region65
    $region64: #{tpu_custom_call.1} parent=1 // pred_region
      %s150 = ssub.s32 512, 512
      %151 = vsyncadd [#allocation18], %s150
      %s152 = sshll.u32 [#allocation17], 4
      %s153 = int_to_ptr.vmem [resolvable:$true] %s152
      %158 = dma.hbm_to_vmem [thread:$0]  %s15, 512, %s153, [#allocation18], 128, 128, 8
    $region65: #{tpu_custom_call.1} parent=1 // pred_fallthru
      _
    // Predicated region
    $region66: #{tpu_custom_call.1} parent=1 // pred_check
      _
    $region67: #{tpu_custom_call.1} parent=1 // pred_check_branch
      %160 = sbr.rel (0) target = $region69
    $region68: #{tpu_custom_call.1} parent=1 // pred_region
      _
    $region69: #{tpu_custom_call.1} parent=1 // pred_fallthru
      _
    // Predicated region
    $region70: #{tpu_custom_call.1} parent=1 // pred_check
      _
    $region71: #{tpu_custom_call.1} parent=1 // pred_check_branch
      %162 = sbr.rel (0) target = $region73
    $region72: #{tpu_custom_call.1} parent=1 // pred_region
      %s164 = ssub.s32 768, 768
      %165 = vsyncadd [#allocation18], %s164
      %s166 = sshll.u32 [#allocation19], 4
      %s167 = int_to_ptr.vmem [resolvable:$true] %s166
      %172 = dma.hbm_to_vmem [thread:$0]  %s17, 768, %s167, [#allocation18], 128, 128, 8
    $region73: #{tpu_custom_call.1} parent=1 // pred_fallthru
      _
    // Predicated region
    $region74: #{tpu_custom_call.1} parent=1 // pred_check
      _
    $region75: #{tpu_custom_call.1} parent=1 // pred_check_branch
      %174 = sbr.rel (0) target = $region77
    $region76: #{tpu_custom_call.1} parent=1 // pred_region
      _
    $region77: #{tpu_custom_call.1} parent=1 // pred_fallthru
      _
    // Predicated region
    $region78: #{tpu_custom_call.1} parent=1 // pred_check
      _
    $region79: #{tpu_custom_call.1} parent=1 // pred_check_branch
      %176 = sbr.rel (0) target = $region81
    $region80: #{tpu_custom_call.1} parent=1 // pred_region
      %177 = dma.done [#allocation3], 64
    $region81: #{tpu_custom_call.1} parent=1 // pred_fallthru
      _
    // Predicated region
    $region82: #{tpu_custom_call.1} parent=1 // pred_check
      _
    $region83: #{tpu_custom_call.1} parent=1 // pred_check_branch
      %179 = sbr.rel (0) target = $region85
    $region84: #{tpu_custom_call.1} parent=1 // pred_region
      %180 = dma.done [#allocation6], 16
    $region85: #{tpu_custom_call.1} parent=1 // pred_fallthru
      _
    // Predicated region
    $region86: #{tpu_custom_call.1} parent=1 // pred_check
      _
    $region87: #{tpu_custom_call.1} parent=1 // pred_check_branch
      %182 = sbr.rel (0) target = $region89
    $region88: #{tpu_custom_call.1} parent=1 // pred_region
      %183 = dma.done [#allocation6], 1024
    $region89: #{tpu_custom_call.1} parent=1 // pred_fallthru
      _
    // Predicated region
    $region90: #{tpu_custom_call.1} parent=1 // pred_check
      _
    $region91: #{tpu_custom_call.1} parent=1 // pred_check_branch
      %185 = sbr.rel (0) target = $region93
    $region92: #{tpu_custom_call.1} parent=1 // pred_region
      %186 = dma.done [#allocation9], 32
    $region93: #{tpu_custom_call.1} parent=1 // pred_fallthru
      _
    // Predicated region
    $region94: #{tpu_custom_call.1} parent=1 // pred_check
      _
    $region95: #{tpu_custom_call.1} parent=1 // pred_check_branch
      %188 = sbr.rel (0) target = $region97
    $region96: #{tpu_custom_call.1} parent=1 // pred_region
      %189 = dma.done [#allocation9], 2048
    $region97: #{tpu_custom_call.1} parent=1 // pred_fallthru
      _
    // Predicated region
    $region98: #{tpu_custom_call.1} parent=1 // pred_check
      _
    $region99: #{tpu_custom_call.1} parent=1 // pred_check_branch
      %191 = sbr.rel (0) target = $region101
    $region100: #{tpu_custom_call.1} parent=1 // pred_region
      %192 = dma.done [#allocation12], 32
    $region101: #{tpu_custom_call.1} parent=1 // pred_fallthru
      _
    // Predicated region
    $region102: #{tpu_custom_call.1} parent=1 // pred_check
      _
    $region103: #{tpu_custom_call.1} parent=1 // pred_check_branch
      %194 = sbr.rel (0) target = $region105
    $region104: #{tpu_custom_call.1} parent=1 // pred_region
      %195 = dma.done [#allocation12], 512
    $region105: #{tpu_custom_call.1} parent=1 // pred_fallthru
      _
    // Predicated region
    $region106: #{tpu_custom_call.1} parent=1 // pred_check
      _
    $region107: #{tpu_custom_call.1} parent=1 // pred_check_branch
      %197 = sbr.rel (0) target = $region109
    $region108: #{tpu_custom_call.1} parent=1 // pred_region
      %198 = dma.done [#allocation15], 512
    $region109: #{tpu_custom_call.1} parent=1 // pred_fallthru
      _
    // Predicated region
    $region110: #{tpu_custom_call.1} parent=1 // pred_check
      _
    $region111: #{tpu_custom_call.1} parent=1 // pred_check_branch
      %200 = sbr.rel (0) target = $region113
    $region112: #{tpu_custom_call.1} parent=1 // pred_region
      %201 = dma.done [#allocation15], 512
    $region113: #{tpu_custom_call.1} parent=1 // pred_fallthru
      _
    // Predicated region
    $region114: #{tpu_custom_call.1} parent=1 // pred_check
      _
    $region115: #{tpu_custom_call.1} parent=1 // pred_check_branch
      %203 = sbr.rel (0) target = $region117
    $region116: #{tpu_custom_call.1} parent=1 // pred_region
      %204 = dma.done [#allocation18], 512
    $region117: #{tpu_custom_call.1} parent=1 // pred_fallthru
      _
    // Predicated region
    $region118: #{tpu_custom_call.1} parent=1 // pred_check
      _
    $region119: #{tpu_custom_call.1} parent=1 // pred_check_branch
      %206 = sbr.rel (0) target = $region121
    $region120: #{tpu_custom_call.1} parent=1 // pred_region
      %207 = dma.done [#allocation18], 768
    $region121: #{tpu_custom_call.1} parent=1 // pred_fallthru
      _
    %v208 = vld [vmem:[%s0] sm:$0xff]
    %v209 = vld [vmem:[%s0 + $0x8] sm:$0xff]
    %v210 = vld [vmem:[%s0 + $0x10] sm:$0xff]
    %v211 = vld [vmem:[%s0 + $0x18] sm:$0xff]
    %v212 = vld [vmem:[#allocation2] sm:$0xf]
    %v213 = vld [vmem:[#allocation5] sm:$0x1]
    %v215 = vlaneseq
    %v216 = vshrl.u32 %v215, 7
    %v217 = vsub.s32 0, %v216
    %v218 = vrot.slane %v213, %v217
    %vm220 = vcmask 31744
    %v222 = vsel %vm220, %v208, 0
    %v225 = vsel %vm220, %v209, 0
    %v228 = vsel %vm220, %v210, 0
    %v231 = vsel %vm220, %v211, 0
    %vm233 = vcmask 1043456
    %v235 = vsel %vm233, %v212, 0
    %237 = vmatprep.subr.mxu0 0.0
    %238 = vmatpush1.msra.mxu0 %v235
    %239 = vmatprep.subr.mxu0 0.0
    %240 = vmatpush1.msra.mxu0 0.0
    %241 = vmatprep.subr.mxu0 0.0
    %242 = vmatpush1.msra.mxu0 0.0
    %243 = vmatprep.subr.mxu0 0.0
    %244 = vmatpush1.msra.mxu0 0.0
    %245 = vmatprep.subr.mxu0 0.0
    %246 = vmatpush1.msra.mxu0 0.0
    %247 = vmatprep.subr.mxu0 0.0
    %248 = vmatpush1.msra.mxu0 0.0
    %249 = vmatprep.subr.mxu0 0.0
    %250 = vmatpush1.msra.mxu0 0.0
    %251 = vmatprep.subr.mxu0 0.0
    %252 = vmatpush1.msra.mxu0 0.0
    %253 = vmatprep.subr.mxu0 0.0
    %254 = vmatpush1.msra.mxu0 0.0
    %255 = vmatprep.subr.mxu0 0.0
    %256 = vmatpush1.msra.mxu0 0.0
    %257 = vmatprep.subr.mxu0 0.0
    %258 = vmatpush1.msra.mxu0 0.0
    %259 = vmatprep.subr.mxu0 0.0
    %260 = vmatpush1.msra.mxu0 0.0
    %261 = vmatprep.subr.mxu0 0.0
    %262 = vmatpush1.msra.mxu0 0.0
    %263 = vmatprep.subr.mxu0 0.0
    %264 = vmatpush1.msra.mxu0 0.0
    %265 = vmatprep.subr.mxu0 0.0
    %266 = vmatpush1.msra.mxu0 0.0
    %267 = vmatprep.subr.mxu0 0.0
    %268 = vmatpush1.msra.mxu0 0.0
    %269 = vmatprep.subr.mxu0 0.0
    %270 = vmatpush1.msra.mxu0 0.0
    %271 = vmatprep.subr.mxu0 0.0
    %272 = vmatpush1.msra.mxu0 0.0
    %273 = vmatprep.subr.mxu0 0.0
    %274 = vmatpush1.msra.mxu0 0.0
    %275 = vmatprep.subr.mxu0 0.0
    %276 = vmatpush1.msra.mxu0 0.0
    %277 = vmatprep.subr.mxu0 0.0
    %278 = vmatpush1.msra.mxu0 0.0
    %279 = vmatprep.subr.mxu0 0.0
    %280 = vmatpush1.msra.mxu0 0.0
    %281 = vmatprep.subr.mxu0 0.0
    %282 = vmatpush1.msra.mxu0 0.0
    %283 = vmatprep.subr.mxu0 0.0
    %284 = vmatpush1.msra.mxu0 0.0
    %285 = vmatprep.subr.mxu0 0.0
    %286 = vmatpush1.msra.mxu0 0.0
    %287 = vmatprep.subr.mxu0 0.0
    %288 = vmatpush1.msra.mxu0 0.0
    %289 = vmatprep.subr.mxu0 0.0
    %290 = vmatpush1.msra.mxu0 0.0
    %291 = vmatprep.subr.mxu0 0.0
    %292 = vmatpush1.msra.mxu0 0.0
    %293 = vmatprep.subr.mxu0 0.0
    %294 = vmatpush1.msra.mxu0 0.0
    %295 = vmatprep.subr.mxu0 0.0
    %296 = vmatpush1.msra.mxu0 0.0
    %297 = vmatprep.subr.mxu0 0.0
    %298 = vmatpush1.msra.mxu0 0.0
    %299 = vmatprep.subr.mxu0 0.0
    %300 = vmatpush1.msra.mxu0 0.0
    %301 = vmatprep.mubr.f32.mxu0 0.0
    %302 = vmatmul.mubr.f32.gmra.mrb[0].mxu0 %v222
    %v303 = vpop.f32.mrb[0].mxu0
    %v304 = vadd.f32 %v218, %v303
    %v305 = vpop.f32.mrb[0].mxu0
    %306 = vmatprep.mubr.f32.mxu0 0.0
    %307 = vmatmul.mubr.f32.gmra.mrb[0].mxu0 %v225
    %v308 = vpop.f32.mrb[0].mxu0
    %v309 = vadd.f32 %v218, %v308
    %v310 = vpop.f32.mrb[0].mxu0
    %311 = vmatprep.mubr.f32.mxu0 0.0
    %312 = vmatmul.mubr.f32.gmra.mrb[0].mxu0 %v228
    %v313 = vpop.f32.mrb[0].mxu0
    %v314 = vadd.f32 %v218, %v313
    %v315 = vpop.f32.mrb[0].mxu0
    %316 = vmatprep.mubr.f32.mxu0 0.0
    %317 = vmatmul.mubr.f32.gmra.mrb[0].mxu0 %v231
    %v318 = vpop.f32.mrb[0].mxu0
    %v319 = vadd.f32 %v218, %v318
    %v320 = vpop.f32.mrb[0].mxu0
    %321 = vdwg.mxu0
    %v322 = vld [vmem:[%s4] sm:$0x1]
    %v324 = vlaneseq
    %v325 = vshrl.u32 %v324, 7
    %v326 = vsub.s32 0, %v325
    %v327 = vrot.slane %v322, %v326
    %v329 = vmul.f32 %v304, %v327
    %v330 = vmul.f32 %v309, %v327
    %v331 = vmul.f32 %v314, %v327
    %v332 = vmul.f32 %v319, %v327
    %v333 = vld [vmem:[#allocation8] sm:$0x1]
    %v335 = vlaneseq
    %v336 = vshrl.u32 %v335, 7
    %v337 = vsub.s32 0, %v336
    %v338 = vrot.slane %v333, %v337
    %v340 = vadd.f32 %v329, %v338
    %v341 = vadd.f32 %v330, %v338
    %v342 = vadd.f32 %v331, %v338
    %v343 = vadd.f32 %v332, %v338
    %v344 = vld [vmem:[#allocation7] sm:$0xff]
    %v345 = vld [vmem:[#allocation7 + $0x8] sm:$0xff]
    %v346 = vld [vmem:[#allocation7 + $0x10] sm:$0xff]
    %v347 = vld [vmem:[#allocation7 + $0x18] sm:$0xff]
    %vm348 = vcmask 261120
    %v350 = vsel %vm348, %v344, 0
    %v353 = vsel %vm348, %v345, 0
    %v356 = vsel %vm348, %v346, 0
    %v359 = vsel %vm348, %v347, 0
    %361 = vmatprep.subr.mxu0 0.0
    %362 = vmatpush1.msra.mxu0 %v340
    %363 = vmatprep.subr.mxu0 0.0
    %364 = vmatpush1.msra.mxu0 %v341
    %365 = vmatprep.subr.mxu0 0.0
    %366 = vmatpush1.msra.mxu0 %v342
    %367 = vmatprep.subr.mxu0 0.0
    %368 = vmatpush1.msra.mxu0 %v343
    %369 = vmatprep.subr.mxu0 0.0
    %370 = vmatpush1.msra.mxu0 0.0
    %371 = vmatprep.subr.mxu0 0.0
    %372 = vmatpush1.msra.mxu0 0.0
    %373 = vmatprep.subr.mxu0 0.0
    %374 = vmatpush1.msra.mxu0 0.0
    %375 = vmatprep.subr.mxu0 0.0
    %376 = vmatpush1.msra.mxu0 0.0
    %377 = vmatprep.subr.mxu0 0.0
    %378 = vmatpush1.msra.mxu0 0.0
    %379 = vmatprep.subr.mxu0 0.0
    %380 = vmatpush1.msra.mxu0 0.0
    %381 = vmatprep.subr.mxu0 0.0
    %382 = vmatpush1.msra.mxu0 0.0
    %383 = vmatprep.subr.mxu0 0.0
    %384 = vmatpush1.msra.mxu0 0.0
    %385 = vmatprep.subr.mxu0 0.0
    %386 = vmatpush1.msra.mxu0 0.0
    %387 = vmatprep.subr.mxu0 0.0
    %388 = vmatpush1.msra.mxu0 0.0
    %389 = vmatprep.subr.mxu0 0.0
    %390 = vmatpush1.msra.mxu0 0.0
    %391 = vmatprep.subr.mxu0 0.0
    %392 = vmatpush1.msra.mxu0 0.0
    %393 = vmatprep.subr.mxu0 0.0
    %394 = vmatpush1.msra.mxu0 0.0
    %395 = vmatprep.subr.mxu0 0.0
    %396 = vmatpush1.msra.mxu0 0.0
    %397 = vmatprep.subr.mxu0 0.0
    %398 = vmatpush1.msra.mxu0 0.0
    %399 = vmatprep.subr.mxu0 0.0
    %400 = vmatpush1.msra.mxu0 0.0
    %401 = vmatprep.subr.mxu0 0.0
    %402 = vmatpush1.msra.mxu0 0.0
    %403 = vmatprep.subr.mxu0 0.0
    %404 = vmatpush1.msra.mxu0 0.0
    %405 = vmatprep.subr.mxu0 0.0
    %406 = vmatpush1.msra.mxu0 0.0
    %407 = vmatprep.subr.mxu0 0.0
    %408 = vmatpush1.msra.mxu0 0.0
    %409 = vmatprep.subr.mxu0 0.0
    %410 = vmatpush1.msra.mxu0 0.0
    %411 = vmatprep.subr.mxu0 0.0
    %412 = vmatpush1.msra.mxu0 0.0
    %413 = vmatprep.subr.mxu0 0.0
    %414 = vmatpush1.msra.mxu0 0.0
    %415 = vmatprep.subr.mxu0 0.0
    %416 = vmatpush1.msra.mxu0 0.0
    %417 = vmatprep.subr.mxu0 0.0
    %418 = vmatpush1.msra.mxu0 0.0
    %419 = vmatprep.subr.mxu0 0.0
    %420 = vmatpush1.msra.mxu0 0.0
    %421 = vmatprep.subr.mxu0 0.0
    %422 = vmatpush1.msra.mxu0 0.0
    %423 = vmatprep.subr.mxu0 0.0
    %424 = vmatpush1.msra.mxu0 0.0
    %425 = vmatprep.mubr.f32.mxu0 0.0
    %426 = vmatmul.mubr.f32.gmra.mrb[0].mxu0 %v350
    %v427 = vpop.f32.mrb[0].mxu0
    %v428 = vadd.f32 0.0, %v427
    %v429 = vpop.f32.mrb[0].mxu0
    %430 = vmatprep.mubr.f32.mxu0 0.0
    %431 = vmatmul.mubr.f32.gmra.mrb[0].mxu0 %v353
    %v432 = vpop.f32.mrb[0].mxu0
    %v433 = vadd.f32 0.0, %v432
    %v434 = vpop.f32.mrb[0].mxu0
    %435 = vmatprep.mubr.f32.mxu0 0.0
    %436 = vmatmul.mubr.f32.gmra.mrb[0].mxu0 %v356
    %v437 = vpop.f32.mrb[0].mxu0
    %v438 = vadd.f32 0.0, %v437
    %v439 = vpop.f32.mrb[0].mxu0
    %440 = vmatprep.mubr.f32.mxu0 0.0
    %441 = vmatmul.mubr.f32.gmra.mrb[0].mxu0 %v359
    %v442 = vpop.f32.mrb[0].mxu0
    %v443 = vadd.f32 0.0, %v442
    %v444 = vpop.f32.mrb[0].mxu0
    %445 = vdwg.mxu0
    %v446 = vld [vmem:[#allocation10] sm:$0xff]
    %v447 = vld [vmem:[#allocation10 + $0x8] sm:$0xff]
    %v448 = vld [vmem:[#allocation10 + $0x10] sm:$0xff]
    %v449 = vld [vmem:[#allocation10 + $0x18] sm:$0xff]
    %v450 = vld [vmem:[#allocation10 + $0x20] sm:$0xff]
    %v451 = vld [vmem:[#allocation10 + $0x28] sm:$0xff]
    %v452 = vld [vmem:[#allocation10 + $0x30] sm:$0xff]
    %v453 = vld [vmem:[#allocation10 + $0x38] sm:$0xff]
    %v455 = vsel %vm348, %v340, 0
    %v458 = vsel %vm348, %v341, 0
    %v461 = vsel %vm348, %v342, 0
    %v464 = vsel %vm348, %v343, 0
    %466 = vmatprep.subr.mxu0 0.0
    %467 = vmatpush1.msra.mxu0 %v450
    %468 = vmatprep.subr.mxu0 0.0
    %469 = vmatpush1.msra.mxu0 %v451
    %470 = vmatprep.subr.mxu0 0.0
    %471 = vmatpush1.msra.mxu0 %v452
    %472 = vmatprep.subr.mxu0 0.0
    %473 = vmatpush1.msra.mxu0 %v453
    %474 = vmatprep.subr.mxu0 0.0
    %475 = vmatpush1.msra.mxu0 0.0
    %476 = vmatprep.subr.mxu0 0.0
    %477 = vmatpush1.msra.mxu0 0.0
    %478 = vmatprep.subr.mxu0 0.0
    %479 = vmatpush1.msra.mxu0 0.0
    %480 = vmatprep.subr.mxu0 0.0
    %481 = vmatpush1.msra.mxu0 0.0
    %482 = vmatprep.subr.mxu0 0.0
    %483 = vmatpush1.msra.mxu0 0.0
    %484 = vmatprep.subr.mxu0 0.0
    %485 = vmatpush1.msra.mxu0 0.0
    %486 = vmatprep.subr.mxu0 0.0
    %487 = vmatpush1.msra.mxu0 0.0
    %488 = vmatprep.subr.mxu0 0.0
    %489 = vmatpush1.msra.mxu0 0.0
    %490 = vmatprep.subr.mxu0 0.0
    %491 = vmatpush1.msra.mxu0 0.0
    %492 = vmatprep.subr.mxu0 0.0
    %493 = vmatpush1.msra.mxu0 0.0
    %494 = vmatprep.subr.mxu0 0.0
    %495 = vmatpush1.msra.mxu0 0.0
    %496 = vmatprep.subr.mxu0 0.0
    %497 = vmatpush1.msra.mxu0 0.0
    %498 = vmatprep.subr.mxu0 0.0
    %499 = vmatpush1.msra.mxu0 0.0
    %500 = vmatprep.subr.mxu0 0.0
    %501 = vmatpush1.msra.mxu0 0.0
    %502 = vmatprep.subr.mxu0 0.0
    %503 = vmatpush1.msra.mxu0 0.0
    %504 = vmatprep.subr.mxu0 0.0
    %505 = vmatpush1.msra.mxu0 0.0
    %506 = vmatprep.subr.mxu0 0.0
    %507 = vmatpush1.msra.mxu0 0.0
    %508 = vmatprep.subr.mxu0 0.0
    %509 = vmatpush1.msra.mxu0 0.0
    %510 = vmatprep.subr.mxu0 0.0
    %511 = vmatpush1.msra.mxu0 0.0
    %512 = vmatprep.subr.mxu0 0.0
    %513 = vmatpush1.msra.mxu0 0.0
    %514 = vmatprep.subr.mxu0 0.0
    %515 = vmatpush1.msra.mxu0 0.0
    %516 = vmatprep.subr.mxu0 0.0
    %517 = vmatpush1.msra.mxu0 0.0
    %518 = vmatprep.subr.mxu0 0.0
    %519 = vmatpush1.msra.mxu0 0.0
    %520 = vmatprep.subr.mxu0 0.0
    %521 = vmatpush1.msra.mxu0 0.0
    %522 = vmatprep.subr.mxu0 0.0
    %523 = vmatpush1.msra.mxu0 0.0
    %524 = vmatprep.subr.mxu0 0.0
    %525 = vmatpush1.msra.mxu0 0.0
    %526 = vmatprep.subr.mxu0 0.0
    %527 = vmatpush1.msra.mxu0 0.0
    %528 = vmatprep.subr.mxu0 0.0
    %529 = vmatpush1.msra.mxu0 0.0
    %530 = vmatprep.mubr.f32.mxu0 0.0
    %531 = vmatmul.mubr.f32.gmra.mrb[0].mxu0 %v455
    %v532 = vpop.f32.mrb[0].mxu0
    %v533 = vadd.f32 0.0, %v532
    %v534 = vpop.f32.mrb[0].mxu0
    %535 = vmatprep.mubr.f32.mxu0 0.0
    %536 = vmatmul.mubr.f32.gmra.mrb[0].mxu0 %v458
    %v537 = vpop.f32.mrb[0].mxu0
    %v538 = vadd.f32 0.0, %v537
    %v539 = vpop.f32.mrb[0].mxu0
    %540 = vmatprep.mubr.f32.mxu0 0.0
    %541 = vmatmul.mubr.f32.gmra.mrb[0].mxu0 %v461
    %v542 = vpop.f32.mrb[0].mxu0
    %v543 = vadd.f32 0.0, %v542
    %v544 = vpop.f32.mrb[0].mxu0
    %545 = vmatprep.mubr.f32.mxu0 0.0
    %546 = vmatmul.mubr.f32.gmra.mrb[0].mxu0 %v464
    %v547 = vpop.f32.mrb[0].mxu0
    %v548 = vadd.f32 0.0, %v547
    %v549 = vpop.f32.mrb[0].mxu0
    %550 = vdwg.mxu0
    %v552 = vsel %vm348, %v428, 0
    %v555 = vsel %vm348, %v433, 0
    %v558 = vsel %vm348, %v438, 0
    %v561 = vsel %vm348, %v443, 0
    %563 = vmatprep.subr.mxu0 0.0
    %564 = vmatpush1.msra.mxu0 %v446
    %565 = vmatprep.subr.mxu0 0.0
    %566 = vmatpush1.msra.mxu0 %v447
    %567 = vmatprep.subr.mxu0 0.0
    %568 = vmatpush1.msra.mxu0 %v448
    %569 = vmatprep.subr.mxu0 0.0
    %570 = vmatpush1.msra.mxu0 %v449
    %571 = vmatprep.subr.mxu0 0.0
    %572 = vmatpush1.msra.mxu0 0.0
    %573 = vmatprep.subr.mxu0 0.0
    %574 = vmatpush1.msra.mxu0 0.0
    %575 = vmatprep.subr.mxu0 0.0
    %576 = vmatpush1.msra.mxu0 0.0
    %577 = vmatprep.subr.mxu0 0.0
    %578 = vmatpush1.msra.mxu0 0.0
    %579 = vmatprep.subr.mxu0 0.0
    %580 = vmatpush1.msra.mxu0 0.0
    %581 = vmatprep.subr.mxu0 0.0
    %582 = vmatpush1.msra.mxu0 0.0
    %583 = vmatprep.subr.mxu0 0.0
    %584 = vmatpush1.msra.mxu0 0.0
    %585 = vmatprep.subr.mxu0 0.0
    %586 = vmatpush1.msra.mxu0 0.0
    %587 = vmatprep.subr.mxu0 0.0
    %588 = vmatpush1.msra.mxu0 0.0
    %589 = vmatprep.subr.mxu0 0.0
    %590 = vmatpush1.msra.mxu0 0.0
    %591 = vmatprep.subr.mxu0 0.0
    %592 = vmatpush1.msra.mxu0 0.0
    %593 = vmatprep.subr.mxu0 0.0
    %594 = vmatpush1.msra.mxu0 0.0
    %595 = vmatprep.subr.mxu0 0.0
    %596 = vmatpush1.msra.mxu0 0.0
    %597 = vmatprep.subr.mxu0 0.0
    %598 = vmatpush1.msra.mxu0 0.0
    %599 = vmatprep.subr.mxu0 0.0
    %600 = vmatpush1.msra.mxu0 0.0
    %601 = vmatprep.subr.mxu0 0.0
    %602 = vmatpush1.msra.mxu0 0.0
    %603 = vmatprep.subr.mxu0 0.0
    %604 = vmatpush1.msra.mxu0 0.0
    %605 = vmatprep.subr.mxu0 0.0
    %606 = vmatpush1.msra.mxu0 0.0
    %607 = vmatprep.subr.mxu0 0.0
    %608 = vmatpush1.msra.mxu0 0.0
    %609 = vmatprep.subr.mxu0 0.0
    %610 = vmatpush1.msra.mxu0 0.0
    %611 = vmatprep.subr.mxu0 0.0
    %612 = vmatpush1.msra.mxu0 0.0
    %613 = vmatprep.subr.mxu0 0.0
    %614 = vmatpush1.msra.mxu0 0.0
    %615 = vmatprep.subr.mxu0 0.0
    %616 = vmatpush1.msra.mxu0 0.0
    %617 = vmatprep.subr.mxu0 0.0
    %618 = vmatpush1.msra.mxu0 0.0
    %619 = vmatprep.subr.mxu0 0.0
    %620 = vmatpush1.msra.mxu0 0.0
    %621 = vmatprep.subr.mxu0 0.0
    %622 = vmatpush1.msra.mxu0 0.0
    %623 = vmatprep.subr.mxu0 0.0
    %624 = vmatpush1.msra.mxu0 0.0
    %625 = vmatprep.subr.mxu0 0.0
    %626 = vmatpush1.msra.mxu0 0.0
    %627 = vmatprep.mubr.f32.mxu0 0.0
    %628 = vmatmul.mubr.f32.gmra.mrb[0].mxu0 %v552
    %v629 = vpop.f32.mrb[0].mxu0
    %v630 = vadd.f32 %v533, %v629
    %v631 = vpop.f32.mrb[0].mxu0
    %632 = vmatprep.mubr.f32.mxu0 0.0
    %633 = vmatmul.mubr.f32.gmra.mrb[0].mxu0 %v555
    %v634 = vpop.f32.mrb[0].mxu0
    %v635 = vadd.f32 %v538, %v634
    %v636 = vpop.f32.mrb[0].mxu0
    %637 = vmatprep.mubr.f32.mxu0 0.0
    %638 = vmatmul.mubr.f32.gmra.mrb[0].mxu0 %v558
    %v639 = vpop.f32.mrb[0].mxu0
    %v640 = vadd.f32 %v543, %v639
    %v641 = vpop.f32.mrb[0].mxu0
    %642 = vmatprep.mubr.f32.mxu0 0.0
    %643 = vmatmul.mubr.f32.gmra.mrb[0].mxu0 %v561
    %v644 = vpop.f32.mrb[0].mxu0
    %v645 = vadd.f32 %v548, %v644
    %v646 = vpop.f32.mrb[0].mxu0
    %647 = vdwg.mxu0
    %v648 = vld [vmem:[#allocation11] sm:$0x1]
    %v650 = vlaneseq
    %v651 = vshrl.u32 %v650, 7
    %v652 = vsub.s32 0, %v651
    %v653 = vrot.slane %v648, %v652
    %v655 = vadd.f32 %v630, %v653
    %v656 = vadd.f32 %v635, %v653
    %v657 = vadd.f32 %v640, %v653
    %v658 = vadd.f32 %v645, %v653
    %v659 = vtanh.pop %v655
    %v660 = vtanh.pop %v656
    %v661 = vtanh.pop %v657
    %v662 = vtanh.pop %v658
    %v663 = vxor.u32 %v655, 2147483648
    %v664 = vxor.u32 %v656, 2147483648
    %v665 = vxor.u32 %v657, 2147483648
    %v666 = vxor.u32 %v658, 2147483648
    %v667 = vmul.f32 %v663, 1.442695
    %v668 = vpow.pop %v667
    %v669 = vmul.f32 %v664, 1.442695
    %v670 = vpow.pop %v669
    %v671 = vmul.f32 %v665, 1.442695
    %v672 = vpow.pop %v671
    %v673 = vmul.f32 %v666, 1.442695
    %v674 = vpow.pop %v673
    %v675 = vadd.f32 %v668, 1.0
    %v676 = vadd.f32 %v670, 1.0
    %v677 = vadd.f32 %v672, 1.0
    %v678 = vadd.f32 %v674, 1.0
    %v679 = vrcp.pop %v675
    %v680 = vmul.f32 1.0, %v679
    %v681 = vrcp.pop %v676
    %v682 = vmul.f32 1.0, %v681
    %v683 = vrcp.pop %v677
    %v684 = vmul.f32 1.0, %v683
    %v685 = vrcp.pop %v678
    %v686 = vmul.f32 1.0, %v685
    %691 = vrot.lane.b32.xlu0 %v680, 96
    %v692 = vpop.permute.xlu0 %691
    %693 = vrot.lane.b32.xlu0 %v682, 96
    %v694 = vpop.permute.xlu0 %693
    %695 = vrot.lane.b32.xlu0 %v684, 96
    %v696 = vpop.permute.xlu0 %695
    %697 = vrot.lane.b32.xlu0 %v686, 96
    %v698 = vpop.permute.xlu0 %697
    %v703 = vmul.f32 %v659, %v692
    %v704 = vmul.f32 %v660, %v694
    %v705 = vmul.f32 %v661, %v696
    %v706 = vmul.f32 %v662, %v698
    %v707 = vld [vmem:[%s8] sm:$0xff]
    %v708 = vld [vmem:[%s8 + $0x8] sm:$0xff]
    %v709 = vld [vmem:[%s8 + $0x10] sm:$0xff]
    %v710 = vld [vmem:[%s8 + $0x18] sm:$0xff]
    %v711 = vld [vmem:[%s9] sm:$0x1]
    %v713 = vlaneseq
    %v714 = vshrl.u32 %v713, 7
    %v715 = vsub.s32 0, %v714
    %v716 = vrot.slane %v711, %v715
    %v719 = vsel %vm348, %v703, 0
    %v722 = vsel %vm348, %v704, 0
    %v725 = vsel %vm348, %v705, 0
    %v728 = vsel %vm348, %v706, 0
    %730 = vmatprep.subr.mxu0 0.0
    %731 = vmatpush1.msra.mxu0 %v707
    %732 = vmatprep.subr.mxu0 0.0
    %733 = vmatpush1.msra.mxu0 %v708
    %734 = vmatprep.subr.mxu0 0.0
    %735 = vmatpush1.msra.mxu0 %v709
    %736 = vmatprep.subr.mxu0 0.0
    %737 = vmatpush1.msra.mxu0 %v710
    %738 = vmatprep.subr.mxu0 0.0
    %739 = vmatpush1.msra.mxu0 0.0
    %740 = vmatprep.subr.mxu0 0.0
    %741 = vmatpush1.msra.mxu0 0.0
    %742 = vmatprep.subr.mxu0 0.0
    %743 = vmatpush1.msra.mxu0 0.0
    %744 = vmatprep.subr.mxu0 0.0
    %745 = vmatpush1.msra.mxu0 0.0
    %746 = vmatprep.subr.mxu0 0.0
    %747 = vmatpush1.msra.mxu0 0.0
    %748 = vmatprep.subr.mxu0 0.0
    %749 = vmatpush1.msra.mxu0 0.0
    %750 = vmatprep.subr.mxu0 0.0
    %751 = vmatpush1.msra.mxu0 0.0
    %752 = vmatprep.subr.mxu0 0.0
    %753 = vmatpush1.msra.mxu0 0.0
    %754 = vmatprep.subr.mxu0 0.0
    %755 = vmatpush1.msra.mxu0 0.0
    %756 = vmatprep.subr.mxu0 0.0
    %757 = vmatpush1.msra.mxu0 0.0
    %758 = vmatprep.subr.mxu0 0.0
    %759 = vmatpush1.msra.mxu0 0.0
    %760 = vmatprep.subr.mxu0 0.0
    %761 = vmatpush1.msra.mxu0 0.0
    %762 = vmatprep.subr.mxu0 0.0
    %763 = vmatpush1.msra.mxu0 0.0
    %764 = vmatprep.subr.mxu0 0.0
    %765 = vmatpush1.msra.mxu0 0.0
    %766 = vmatprep.subr.mxu0 0.0
    %767 = vmatpush1.msra.mxu0 0.0
    %768 = vmatprep.subr.mxu0 0.0
    %769 = vmatpush1.msra.mxu0 0.0
    %770 = vmatprep.subr.mxu0 0.0
    %771 = vmatpush1.msra.mxu0 0.0
    %772 = vmatprep.subr.mxu0 0.0
    %773 = vmatpush1.msra.mxu0 0.0
    %774 = vmatprep.subr.mxu0 0.0
    %775 = vmatpush1.msra.mxu0 0.0
    %776 = vmatprep.subr.mxu0 0.0
    %777 = vmatpush1.msra.mxu0 0.0
    %778 = vmatprep.subr.mxu0 0.0
    %779 = vmatpush1.msra.mxu0 0.0
    %780 = vmatprep.subr.mxu0 0.0
    %781 = vmatpush1.msra.mxu0 0.0
    %782 = vmatprep.subr.mxu0 0.0
    %783 = vmatpush1.msra.mxu0 0.0
    %784 = vmatprep.subr.mxu0 0.0
    %785 = vmatpush1.msra.mxu0 0.0
    %786 = vmatprep.subr.mxu0 0.0
    %787 = vmatpush1.msra.mxu0 0.0
    %788 = vmatprep.subr.mxu0 0.0
    %789 = vmatpush1.msra.mxu0 0.0
    %790 = vmatprep.subr.mxu0 0.0
    %791 = vmatpush1.msra.mxu0 0.0
    %792 = vmatprep.subr.mxu0 0.0
    %793 = vmatpush1.msra.mxu0 0.0
    %794 = vmatprep.mubr.f32.mxu0 0.0
    %795 = vmatmul.mubr.f32.gmra.mrb[0].mxu0 %v719
    %v796 = vpop.f32.mrb[0].mxu0
    %v797 = vadd.f32 %v716, %v796
    %v798 = vpop.f32.mrb[0].mxu0
    %799 = vmatprep.mubr.f32.mxu0 0.0
    %800 = vmatmul.mubr.f32.gmra.mrb[0].mxu0 %v722
    %v801 = vpop.f32.mrb[0].mxu0
    %v802 = vadd.f32 %v716, %v801
    %v803 = vpop.f32.mrb[0].mxu0
    %804 = vmatprep.mubr.f32.mxu0 0.0
    %805 = vmatmul.mubr.f32.gmra.mrb[0].mxu0 %v725
    %v806 = vpop.f32.mrb[0].mxu0
    %v807 = vadd.f32 %v716, %v806
    %v808 = vpop.f32.mrb[0].mxu0
    %809 = vmatprep.mubr.f32.mxu0 0.0
    %810 = vmatmul.mubr.f32.gmra.mrb[0].mxu0 %v728
    %v811 = vpop.f32.mrb[0].mxu0
    %v812 = vadd.f32 %v716, %v811
    %v813 = vpop.f32.mrb[0].mxu0
    %814 = vdwg.mxu0
    %v815 = vadd.f32 %v797, %v340
    %v816 = vadd.f32 %v802, %v341
    %v817 = vadd.f32 %v807, %v342
    %v818 = vadd.f32 %v812, %v343
    %v819 = vadd.f32 %v797, 0.0
    %v820 = vadd.f32 %v802, 0.0
    %v821 = vadd.f32 %v807, 0.0
    %v822 = vadd.f32 %v812, 0.0
    %s823 = scalar_lea.vmem %s4, 1
    %v824 = vld [vmem:[%s823] sm:$0x1]
    %v826 = vlaneseq
    %v827 = vshrl.u32 %v826, 7
    %v828 = vsub.s32 0, %v827
    %v829 = vrot.slane %v824, %v828
    %v831 = vmul.f32 %v815, %v829
    %v832 = vmul.f32 %v816, %v829
    %v833 = vmul.f32 %v817, %v829
    %v834 = vmul.f32 %v818, %v829
    %s835 = scalar_lea.vmem [#allocation8], 1
    %v836 = vld [vmem:[%s835] sm:$0x1]
    %v838 = vlaneseq
    %v839 = vshrl.u32 %v838, 7
    %v840 = vsub.s32 0, %v839
    %v841 = vrot.slane %v836, %v840
    %v843 = vadd.f32 %v831, %v841
    %v844 = vadd.f32 %v832, %v841
    %v845 = vadd.f32 %v833, %v841
    %v846 = vadd.f32 %v834, %v841
    %s847 = scalar_lea.vmem [#allocation7], 32
    %v848 = vld [vmem:[%s847] sm:$0xff]
    %v849 = vld [vmem:[%s847 + $0x8] sm:$0xff]
    %v850 = vld [vmem:[%s847 + $0x10] sm:$0xff]
    %v851 = vld [vmem:[%s847 + $0x18] sm:$0xff]
    %v853 = vsel %vm348, %v848, 0
    %v856 = vsel %vm348, %v849, 0
    %v859 = vsel %vm348, %v850, 0
    %v862 = vsel %vm348, %v851, 0
    %864 = vmatprep.subr.mxu0 0.0
    %865 = vmatpush1.msra.mxu0 %v843
    %866 = vmatprep.subr.mxu0 0.0
    %867 = vmatpush1.msra.mxu0 %v844
    %868 = vmatprep.subr.mxu0 0.0
    %869 = vmatpush1.msra.mxu0 %v845
    %870 = vmatprep.subr.mxu0 0.0
    %871 = vmatpush1.msra.mxu0 %v846
    %872 = vmatprep.subr.mxu0 0.0
    %873 = vmatpush1.msra.mxu0 0.0
    %874 = vmatprep.subr.mxu0 0.0
    %875 = vmatpush1.msra.mxu0 0.0
    %876 = vmatprep.subr.mxu0 0.0
    %877 = vmatpush1.msra.mxu0 0.0
    %878 = vmatprep.subr.mxu0 0.0
    %879 = vmatpush1.msra.mxu0 0.0
    %880 = vmatprep.subr.mxu0 0.0
    %881 = vmatpush1.msra.mxu0 0.0
    %882 = vmatprep.subr.mxu0 0.0
    %883 = vmatpush1.msra.mxu0 0.0
    %884 = vmatprep.subr.mxu0 0.0
    %885 = vmatpush1.msra.mxu0 0.0
    %886 = vmatprep.subr.mxu0 0.0
    %887 = vmatpush1.msra.mxu0 0.0
    %888 = vmatprep.subr.mxu0 0.0
    %889 = vmatpush1.msra.mxu0 0.0
    %890 = vmatprep.subr.mxu0 0.0
    %891 = vmatpush1.msra.mxu0 0.0
    %892 = vmatprep.subr.mxu0 0.0
    %893 = vmatpush1.msra.mxu0 0.0
    %894 = vmatprep.subr.mxu0 0.0
    %895 = vmatpush1.msra.mxu0 0.0
    %896 = vmatprep.subr.mxu0 0.0
    %897 = vmatpush1.msra.mxu0 0.0
    %898 = vmatprep.subr.mxu0 0.0
    %899 = vmatpush1.msra.mxu0 0.0
    %900 = vmatprep.subr.mxu0 0.0
    %901 = vmatpush1.msra.mxu0 0.0
    %902 = vmatprep.subr.mxu0 0.0
    %903 = vmatpush1.msra.mxu0 0.0
    %904 = vmatprep.subr.mxu0 0.0
    %905 = vmatpush1.msra.mxu0 0.0
    %906 = vmatprep.subr.mxu0 0.0
    %907 = vmatpush1.msra.mxu0 0.0
    %908 = vmatprep.subr.mxu0 0.0
    %909 = vmatpush1.msra.mxu0 0.0
    %910 = vmatprep.subr.mxu0 0.0
    %911 = vmatpush1.msra.mxu0 0.0
    %912 = vmatprep.subr.mxu0 0.0
    %913 = vmatpush1.msra.mxu0 0.0
    %914 = vmatprep.subr.mxu0 0.0
    %915 = vmatpush1.msra.mxu0 0.0
    %916 = vmatprep.subr.mxu0 0.0
    %917 = vmatpush1.msra.mxu0 0.0
    %918 = vmatprep.subr.mxu0 0.0
    %919 = vmatpush1.msra.mxu0 0.0
    %920 = vmatprep.subr.mxu0 0.0
    %921 = vmatpush1.msra.mxu0 0.0
    %922 = vmatprep.subr.mxu0 0.0
    %923 = vmatpush1.msra.mxu0 0.0
    %924 = vmatprep.subr.mxu0 0.0
    %925 = vmatpush1.msra.mxu0 0.0
    %926 = vmatprep.subr.mxu0 0.0
    %927 = vmatpush1.msra.mxu0 0.0
    %928 = vmatprep.mubr.f32.mxu0 0.0
    %929 = vmatmul.mubr.f32.gmra.mrb[0].mxu0 %v853
    %v930 = vpop.f32.mrb[0].mxu0
    %v931 = vadd.f32 0.0, %v930
    %v932 = vpop.f32.mrb[0].mxu0
    %933 = vmatprep.mubr.f32.mxu0 0.0
    %934 = vmatmul.mubr.f32.gmra.mrb[0].mxu0 %v856
    %v935 = vpop.f32.mrb[0].mxu0
    %v936 = vadd.f32 0.0, %v935
    %v937 = vpop.f32.mrb[0].mxu0
    %938 = vmatprep.mubr.f32.mxu0 0.0
    %939 = vmatmul.mubr.f32.gmra.mrb[0].mxu0 %v859
    %v940 = vpop.f32.mrb[0].mxu0
    %v941 = vadd.f32 0.0, %v940
    %v942 = vpop.f32.mrb[0].mxu0
    %943 = vmatprep.mubr.f32.mxu0 0.0
    %944 = vmatmul.mubr.f32.gmra.mrb[0].mxu0 %v862
    %v945 = vpop.f32.mrb[0].mxu0
    %v946 = vadd.f32 0.0, %v945
    %v947 = vpop.f32.mrb[0].mxu0
    %948 = vdwg.mxu0
    %s949 = scalar_lea.vmem [#allocation10], 64
    %v950 = vld [vmem:[%s949] sm:$0xff]
    %v951 = vld [vmem:[%s949 + $0x8] sm:$0xff]
    %v952 = vld [vmem:[%s949 + $0x10] sm:$0xff]
    %v953 = vld [vmem:[%s949 + $0x18] sm:$0xff]
    %v954 = vld [vmem:[%s949 + $0x20] sm:$0xff]
    %v955 = vld [vmem:[%s949 + $0x28] sm:$0xff]
    %v956 = vld [vmem:[%s949 + $0x30] sm:$0xff]
    %v957 = vld [vmem:[%s949 + $0x38] sm:$0xff]
    %v959 = vsel %vm348, %v843, 0
    %v962 = vsel %vm348, %v844, 0
    %v965 = vsel %vm348, %v845, 0
    %v968 = vsel %vm348, %v846, 0
    %970 = vmatprep.subr.mxu0 0.0
    %971 = vmatpush1.msra.mxu0 %v954
    %972 = vmatprep.subr.mxu0 0.0
    %973 = vmatpush1.msra.mxu0 %v955
    %974 = vmatprep.subr.mxu0 0.0
    %975 = vmatpush1.msra.mxu0 %v956
    %976 = vmatprep.subr.mxu0 0.0
    %977 = vmatpush1.msra.mxu0 %v957
    %978 = vmatprep.subr.mxu0 0.0
    %979 = vmatpush1.msra.mxu0 0.0
    %980 = vmatprep.subr.mxu0 0.0
    %981 = vmatpush1.msra.mxu0 0.0
    %982 = vmatprep.subr.mxu0 0.0
    %983 = vmatpush1.msra.mxu0 0.0
    %984 = vmatprep.subr.mxu0 0.0
    %985 = vmatpush1.msra.mxu0 0.0
    %986 = vmatprep.subr.mxu0 0.0
    %987 = vmatpush1.msra.mxu0 0.0
    %988 = vmatprep.subr.mxu0 0.0
    %989 = vmatpush1.msra.mxu0 0.0
    %990 = vmatprep.subr.mxu0 0.0
    %991 = vmatpush1.msra.mxu0 0.0
    %992 = vmatprep.subr.mxu0 0.0
    %993 = vmatpush1.msra.mxu0 0.0
    %994 = vmatprep.subr.mxu0 0.0
    %995 = vmatpush1.msra.mxu0 0.0
    %996 = vmatprep.subr.mxu0 0.0
    %997 = vmatpush1.msra.mxu0 0.0
    %998 = vmatprep.subr.mxu0 0.0
    %999 = vmatpush1.msra.mxu0 0.0
    %1000 = vmatprep.subr.mxu0 0.0
    %1001 = vmatpush1.msra.mxu0 0.0
    %1002 = vmatprep.subr.mxu0 0.0
    %1003 = vmatpush1.msra.mxu0 0.0
    %1004 = vmatprep.subr.mxu0 0.0
    %1005 = vmatpush1.msra.mxu0 0.0
    %1006 = vmatprep.subr.mxu0 0.0
    %1007 = vmatpush1.msra.mxu0 0.0
    %1008 = vmatprep.subr.mxu0 0.0
    %1009 = vmatpush1.msra.mxu0 0.0
    %1010 = vmatprep.subr.mxu0 0.0
    %1011 = vmatpush1.msra.mxu0 0.0
    %1012 = vmatprep.subr.mxu0 0.0
    %1013 = vmatpush1.msra.mxu0 0.0
    %1014 = vmatprep.subr.mxu0 0.0
    %1015 = vmatpush1.msra.mxu0 0.0
    %1016 = vmatprep.subr.mxu0 0.0
    %1017 = vmatpush1.msra.mxu0 0.0
    %1018 = vmatprep.subr.mxu0 0.0
    %1019 = vmatpush1.msra.mxu0 0.0
    %1020 = vmatprep.subr.mxu0 0.0
    %1021 = vmatpush1.msra.mxu0 0.0
    %1022 = vmatprep.subr.mxu0 0.0
    %1023 = vmatpush1.msra.mxu0 0.0
    %1024 = vmatprep.subr.mxu0 0.0
    %1025 = vmatpush1.msra.mxu0 0.0
    %1026 = vmatprep.subr.mxu0 0.0
    %1027 = vmatpush1.msra.mxu0 0.0
    %1028 = vmatprep.subr.mxu0 0.0
    %1029 = vmatpush1.msra.mxu0 0.0
    %1030 = vmatprep.subr.mxu0 0.0
    %1031 = vmatpush1.msra.mxu0 0.0
    %1032 = vmatprep.subr.mxu0 0.0
    %1033 = vmatpush1.msra.mxu0 0.0
    %1034 = vmatprep.mubr.f32.mxu0 0.0
    %1035 = vmatmul.mubr.f32.gmra.mrb[0].mxu0 %v959
    %v1036 = vpop.f32.mrb[0].mxu0
    %v1037 = vadd.f32 0.0, %v1036
    %v1038 = vpop.f32.mrb[0].mxu0
    %1039 = vmatprep.mubr.f32.mxu0 0.0
    %1040 = vmatmul.mubr.f32.gmra.mrb[0].mxu0 %v962
    %v1041 = vpop.f32.mrb[0].mxu0
    %v1042 = vadd.f32 0.0, %v1041
    %v1043 = vpop.f32.mrb[0].mxu0
    %1044 = vmatprep.mubr.f32.mxu0 0.0
    %1045 = vmatmul.mubr.f32.gmra.mrb[0].mxu0 %v965
    %v1046 = vpop.f32.mrb[0].mxu0
    %v1047 = vadd.f32 0.0, %v1046
    %v1048 = vpop.f32.mrb[0].mxu0
    %1049 = vmatprep.mubr.f32.mxu0 0.0
    %1050 = vmatmul.mubr.f32.gmra.mrb[0].mxu0 %v968
    %v1051 = vpop.f32.mrb[0].mxu0
    %v1052 = vadd.f32 0.0, %v1051
    %v1053 = vpop.f32.mrb[0].mxu0
    %1054 = vdwg.mxu0
    %v1056 = vsel %vm348, %v931, 0
    %v1059 = vsel %vm348, %v936, 0
    %v1062 = vsel %vm348, %v941, 0
    %v1065 = vsel %vm348, %v946, 0
    %1067 = vmatprep.subr.mxu0 0.0
    %1068 = vmatpush1.msra.mxu0 %v950
    %1069 = vmatprep.subr.mxu0 0.0
    %1070 = vmatpush1.msra.mxu0 %v951
    %1071 = vmatprep.subr.mxu0 0.0
    %1072 = vmatpush1.msra.mxu0 %v952
    %1073 = vmatprep.subr.mxu0 0.0
    %1074 = vmatpush1.msra.mxu0 %v953
    %1075 = vmatprep.subr.mxu0 0.0
    %1076 = vmatpush1.msra.mxu0 0.0
    %1077 = vmatprep.subr.mxu0 0.0
    %1078 = vmatpush1.msra.mxu0 0.0
    %1079 = vmatprep.subr.mxu0 0.0
    %1080 = vmatpush1.msra.mxu0 0.0
    %1081 = vmatprep.subr.mxu0 0.0
    %1082 = vmatpush1.msra.mxu0 0.0
    %1083 = vmatprep.subr.mxu0 0.0
    %1084 = vmatpush1.msra.mxu0 0.0
    %1085 = vmatprep.subr.mxu0 0.0
    %1086 = vmatpush1.msra.mxu0 0.0
    %1087 = vmatprep.subr.mxu0 0.0
    %1088 = vmatpush1.msra.mxu0 0.0
    %1089 = vmatprep.subr.mxu0 0.0
    %1090 = vmatpush1.msra.mxu0 0.0
    %1091 = vmatprep.subr.mxu0 0.0
    %1092 = vmatpush1.msra.mxu0 0.0
    %1093 = vmatprep.subr.mxu0 0.0
    %1094 = vmatpush1.msra.mxu0 0.0
    %1095 = vmatprep.subr.mxu0 0.0
    %1096 = vmatpush1.msra.mxu0 0.0
    %1097 = vmatprep.subr.mxu0 0.0
    %1098 = vmatpush1.msra.mxu0 0.0
    %1099 = vmatprep.subr.mxu0 0.0
    %1100 = vmatpush1.msra.mxu0 0.0
    %1101 = vmatprep.subr.mxu0 0.0
    %1102 = vmatpush1.msra.mxu0 0.0
    %1103 = vmatprep.subr.mxu0 0.0
    %1104 = vmatpush1.msra.mxu0 0.0
    %1105 = vmatprep.subr.mxu0 0.0
    %1106 = vmatpush1.msra.mxu0 0.0
    %1107 = vmatprep.subr.mxu0 0.0
    %1108 = vmatpush1.msra.mxu0 0.0
    %1109 = vmatprep.subr.mxu0 0.0
    %1110 = vmatpush1.msra.mxu0 0.0
    %1111 = vmatprep.subr.mxu0 0.0
    %1112 = vmatpush1.msra.mxu0 0.0
    %1113 = vmatprep.subr.mxu0 0.0
    %1114 = vmatpush1.msra.mxu0 0.0
    %1115 = vmatprep.subr.mxu0 0.0
    %1116 = vmatpush1.msra.mxu0 0.0
    %1117 = vmatprep.subr.mxu0 0.0
    %1118 = vmatpush1.msra.mxu0 0.0
    %1119 = vmatprep.subr.mxu0 0.0
    %1120 = vmatpush1.msra.mxu0 0.0
    %1121 = vmatprep.subr.mxu0 0.0
    %1122 = vmatpush1.msra.mxu0 0.0
    %1123 = vmatprep.subr.mxu0 0.0
    %1124 = vmatpush1.msra.mxu0 0.0
    %1125 = vmatprep.subr.mxu0 0.0
    %1126 = vmatpush1.msra.mxu0 0.0
    %1127 = vmatprep.subr.mxu0 0.0
    %1128 = vmatpush1.msra.mxu0 0.0
    %1129 = vmatprep.subr.mxu0 0.0
    %1130 = vmatpush1.msra.mxu0 0.0
    %1131 = vmatprep.mubr.f32.mxu0 0.0
    %1132 = vmatmul.mubr.f32.gmra.mrb[0].mxu0 %v1056
    %v1133 = vpop.f32.mrb[0].mxu0
    %v1134 = vadd.f32 %v1037, %v1133
    %v1135 = vpop.f32.mrb[0].mxu0
    %1136 = vmatprep.mubr.f32.mxu0 0.0
    %1137 = vmatmul.mubr.f32.gmra.mrb[0].mxu0 %v1059
    %v1138 = vpop.f32.mrb[0].mxu0
    %v1139 = vadd.f32 %v1042, %v1138
    %v1140 = vpop.f32.mrb[0].mxu0
    %1141 = vmatprep.mubr.f32.mxu0 0.0
    %1142 = vmatmul.mubr.f32.gmra.mrb[0].mxu0 %v1062
    %v1143 = vpop.f32.mrb[0].mxu0
    %v1144 = vadd.f32 %v1047, %v1143
    %v1145 = vpop.f32.mrb[0].mxu0
    %1146 = vmatprep.mubr.f32.mxu0 0.0
    %1147 = vmatmul.mubr.f32.gmra.mrb[0].mxu0 %v1065
    %v1148 = vpop.f32.mrb[0].mxu0
    %v1149 = vadd.f32 %v1052, %v1148
    %v1150 = vpop.f32.mrb[0].mxu0
    %1151 = vdwg.mxu0
    %s1152 = scalar_lea.vmem [#allocation11], 1
    %v1153 = vld [vmem:[%s1152] sm:$0x1]
    %v1155 = vlaneseq
    %v1156 = vshrl.u32 %v1155, 7
    %v1157 = vsub.s32 0, %v1156
    %v1158 = vrot.slane %v1153, %v1157
    %v1160 = vadd.f32 %v1134, %v1158
    %v1161 = vadd.f32 %v1139, %v1158
    %v1162 = vadd.f32 %v1144, %v1158
    %v1163 = vadd.f32 %v1149, %v1158
    %v1164 = vtanh.pop %v1160
    %v1165 = vtanh.pop %v1161
    %v1166 = vtanh.pop %v1162
    %v1167 = vtanh.pop %v1163
    %v1168 = vxor.u32 %v1160, 2147483648
    %v1169 = vxor.u32 %v1161, 2147483648
    %v1170 = vxor.u32 %v1162, 2147483648
    %v1171 = vxor.u32 %v1163, 2147483648
    %v1172 = vmul.f32 %v1168, 1.442695
    %v1173 = vpow.pop %v1172
    %v1174 = vmul.f32 %v1169, 1.442695
    %v1175 = vpow.pop %v1174
    %v1176 = vmul.f32 %v1170, 1.442695
    %v1177 = vpow.pop %v1176
    %v1178 = vmul.f32 %v1171, 1.442695
    %v1179 = vpow.pop %v1178
    %v1180 = vadd.f32 %v1173, 1.0
    %v1181 = vadd.f32 %v1175, 1.0
    %v1182 = vadd.f32 %v1177, 1.0
    %v1183 = vadd.f32 %v1179, 1.0
    %v1184 = vrcp.pop %v1180
    %v1185 = vmul.f32 1.0, %v1184
    %v1186 = vrcp.pop %v1181
    %v1187 = vmul.f32 1.0, %v1186
    %v1188 = vrcp.pop %v1182
    %v1189 = vmul.f32 1.0, %v1188
    %v1190 = vrcp.pop %v1183
    %v1191 = vmul.f32 1.0, %v1190
    %1196 = vrot.lane.b32.xlu0 %v1185, 96
    %v1197 = vpop.permute.xlu0 %1196
    %1198 = vrot.lane.b32.xlu0 %v1187, 96
    %v1199 = vpop.permute.xlu0 %1198
    %1200 = vrot.lane.b32.xlu0 %v1189, 96
    %v1201 = vpop.permute.xlu0 %1200
    %1202 = vrot.lane.b32.xlu0 %v1191, 96
    %v1203 = vpop.permute.xlu0 %1202
    %v1208 = vmul.f32 %v1164, %v1197
    %v1209 = vmul.f32 %v1165, %v1199
    %v1210 = vmul.f32 %v1166, %v1201
    %v1211 = vmul.f32 %v1167, %v1203
    %s1212 = scalar_lea.vmem %s8, 32
    %v1213 = vld [vmem:[%s1212] sm:$0xff]
    %v1214 = vld [vmem:[%s1212 + $0x8] sm:$0xff]
    %v1215 = vld [vmem:[%s1212 + $0x10] sm:$0xff]
    %v1216 = vld [vmem:[%s1212 + $0x18] sm:$0xff]
    %s1217 = scalar_lea.vmem %s9, 1
    %v1218 = vld [vmem:[%s1217] sm:$0x1]
    %v1220 = vlaneseq
    %v1221 = vshrl.u32 %v1220, 7
    %v1222 = vsub.s32 0, %v1221
    %v1223 = vrot.slane %v1218, %v1222
    %v1226 = vsel %vm348, %v1208, 0
    %v1229 = vsel %vm348, %v1209, 0
    %v1232 = vsel %vm348, %v1210, 0
    %v1235 = vsel %vm348, %v1211, 0
    %1237 = vmatprep.subr.mxu0 0.0
    %1238 = vmatpush1.msra.mxu0 %v1213
    %1239 = vmatprep.subr.mxu0 0.0
    %1240 = vmatpush1.msra.mxu0 %v1214
    %1241 = vmatprep.subr.mxu0 0.0
    %1242 = vmatpush1.msra.mxu0 %v1215
    %1243 = vmatprep.subr.mxu0 0.0
    %1244 = vmatpush1.msra.mxu0 %v1216
    %1245 = vmatprep.subr.mxu0 0.0
    %1246 = vmatpush1.msra.mxu0 0.0
    %1247 = vmatprep.subr.mxu0 0.0
    %1248 = vmatpush1.msra.mxu0 0.0
    %1249 = vmatprep.subr.mxu0 0.0
    %1250 = vmatpush1.msra.mxu0 0.0
    %1251 = vmatprep.subr.mxu0 0.0
    %1252 = vmatpush1.msra.mxu0 0.0
    %1253 = vmatprep.subr.mxu0 0.0
    %1254 = vmatpush1.msra.mxu0 0.0
    %1255 = vmatprep.subr.mxu0 0.0
    %1256 = vmatpush1.msra.mxu0 0.0
    %1257 = vmatprep.subr.mxu0 0.0
    %1258 = vmatpush1.msra.mxu0 0.0
    %1259 = vmatprep.subr.mxu0 0.0
    %1260 = vmatpush1.msra.mxu0 0.0
    %1261 = vmatprep.subr.mxu0 0.0
    %1262 = vmatpush1.msra.mxu0 0.0
    %1263 = vmatprep.subr.mxu0 0.0
    %1264 = vmatpush1.msra.mxu0 0.0
    %1265 = vmatprep.subr.mxu0 0.0
    %1266 = vmatpush1.msra.mxu0 0.0
    %1267 = vmatprep.subr.mxu0 0.0
    %1268 = vmatpush1.msra.mxu0 0.0
    %1269 = vmatprep.subr.mxu0 0.0
    %1270 = vmatpush1.msra.mxu0 0.0
    %1271 = vmatprep.subr.mxu0 0.0
    %1272 = vmatpush1.msra.mxu0 0.0
    %1273 = vmatprep.subr.mxu0 0.0
    %1274 = vmatpush1.msra.mxu0 0.0
    %1275 = vmatprep.subr.mxu0 0.0
    %1276 = vmatpush1.msra.mxu0 0.0
    %1277 = vmatprep.subr.mxu0 0.0
    %1278 = vmatpush1.msra.mxu0 0.0
    %1279 = vmatprep.subr.mxu0 0.0
    %1280 = vmatpush1.msra.mxu0 0.0
    %1281 = vmatprep.subr.mxu0 0.0
    %1282 = vmatpush1.msra.mxu0 0.0
    %1283 = vmatprep.subr.mxu0 0.0
    %1284 = vmatpush1.msra.mxu0 0.0
    %1285 = vmatprep.subr.mxu0 0.0
    %1286 = vmatpush1.msra.mxu0 0.0
    %1287 = vmatprep.subr.mxu0 0.0
    %1288 = vmatpush1.msra.mxu0 0.0
    %1289 = vmatprep.subr.mxu0 0.0
    %1290 = vmatpush1.msra.mxu0 0.0
    %1291 = vmatprep.subr.mxu0 0.0
    %1292 = vmatpush1.msra.mxu0 0.0
    %1293 = vmatprep.subr.mxu0 0.0
    %1294 = vmatpush1.msra.mxu0 0.0
    %1295 = vmatprep.subr.mxu0 0.0
    %1296 = vmatpush1.msra.mxu0 0.0
    %1297 = vmatprep.subr.mxu0 0.0
    %1298 = vmatpush1.msra.mxu0 0.0
    %1299 = vmatprep.subr.mxu0 0.0
    %1300 = vmatpush1.msra.mxu0 0.0
    %1301 = vmatprep.mubr.f32.mxu0 0.0
    %1302 = vmatmul.mubr.f32.gmra.mrb[0].mxu0 %v1226
    %v1303 = vpop.f32.mrb[0].mxu0
    %v1304 = vadd.f32 %v1223, %v1303
    %v1305 = vpop.f32.mrb[0].mxu0
    %1306 = vmatprep.mubr.f32.mxu0 0.0
    %1307 = vmatmul.mubr.f32.gmra.mrb[0].mxu0 %v1229
    %v1308 = vpop.f32.mrb[0].mxu0
    %v1309 = vadd.f32 %v1223, %v1308
    %v1310 = vpop.f32.mrb[0].mxu0
    %1311 = vmatprep.mubr.f32.mxu0 0.0
    %1312 = vmatmul.mubr.f32.gmra.mrb[0].mxu0 %v1232
    %v1313 = vpop.f32.mrb[0].mxu0
    %v1314 = vadd.f32 %v1223, %v1313
    %v1315 = vpop.f32.mrb[0].mxu0
    %1316 = vmatprep.mubr.f32.mxu0 0.0
    %1317 = vmatmul.mubr.f32.gmra.mrb[0].mxu0 %v1235
    %v1318 = vpop.f32.mrb[0].mxu0
    %v1319 = vadd.f32 %v1223, %v1318
    %v1320 = vpop.f32.mrb[0].mxu0
    %1321 = vdwg.mxu0
    %v1322 = vadd.f32 %v819, %v1304
    %v1323 = vadd.f32 %v820, %v1309
    %v1324 = vadd.f32 %v821, %v1314
    %v1325 = vadd.f32 %v822, %v1319
    %v1326 = vmax.f32 %v1322, 0.0
    %v1327 = vmax.f32 %v1323, 0.0
    %v1328 = vmax.f32 %v1324, 0.0
    %v1329 = vmax.f32 %v1325, 0.0
    %v1330 = vld [vmem:[#allocation13] sm:$0xff]
    %v1331 = vld [vmem:[#allocation13 + $0x8] sm:$0xff]
    %v1332 = vld [vmem:[#allocation13 + $0x10] sm:$0xff]
    %v1333 = vld [vmem:[#allocation13 + $0x18] sm:$0xff]
    %v1334 = vld [vmem:[%s11] sm:$0x1]
    %v1336 = vlaneseq
    %v1337 = vshrl.u32 %v1336, 7
    %v1338 = vsub.s32 0, %v1337
    %v1339 = vrot.slane %v1334, %v1338
    %1345 = vrot.lane.b32.xlu0 %v1326, 96
    %v1346 = vpop.permute.xlu0 %1345
    %1347 = vrot.lane.b32.xlu0 %v1327, 96
    %v1348 = vpop.permute.xlu0 %1347
    %1349 = vrot.lane.b32.xlu0 %v1328, 96
    %v1350 = vpop.permute.xlu0 %1349
    %1351 = vrot.lane.b32.xlu0 %v1329, 96
    %v1352 = vpop.permute.xlu0 %1351
    %v1353 = vsel %vm348, %v1346, 0
    %v1355 = vsel %vm348, %v1348, 0
    %v1357 = vsel %vm348, %v1350, 0
    %v1359 = vsel %vm348, %v1352, 0
    %1361 = vmatprep.subr.mxu0 0.0
    %1362 = vmatpush1.msra.mxu0 %v1330
    %1363 = vmatprep.subr.mxu0 0.0
    %1364 = vmatpush1.msra.mxu0 %v1331
    %1365 = vmatprep.subr.mxu0 0.0
    %1366 = vmatpush1.msra.mxu0 %v1332
    %1367 = vmatprep.subr.mxu0 0.0
    %1368 = vmatpush1.msra.mxu0 %v1333
    %1369 = vmatprep.subr.mxu0 0.0
    %1370 = vmatpush1.msra.mxu0 0.0
    %1371 = vmatprep.subr.mxu0 0.0
    %1372 = vmatpush1.msra.mxu0 0.0
    %1373 = vmatprep.subr.mxu0 0.0
    %1374 = vmatpush1.msra.mxu0 0.0
    %1375 = vmatprep.subr.mxu0 0.0
    %1376 = vmatpush1.msra.mxu0 0.0
    %1377 = vmatprep.subr.mxu0 0.0
    %1378 = vmatpush1.msra.mxu0 0.0
    %1379 = vmatprep.subr.mxu0 0.0
    %1380 = vmatpush1.msra.mxu0 0.0
    %1381 = vmatprep.subr.mxu0 0.0
    %1382 = vmatpush1.msra.mxu0 0.0
    %1383 = vmatprep.subr.mxu0 0.0
    %1384 = vmatpush1.msra.mxu0 0.0
    %1385 = vmatprep.subr.mxu0 0.0
    %1386 = vmatpush1.msra.mxu0 0.0
    %1387 = vmatprep.subr.mxu0 0.0
    %1388 = vmatpush1.msra.mxu0 0.0
    %1389 = vmatprep.subr.mxu0 0.0
    %1390 = vmatpush1.msra.mxu0 0.0
    %1391 = vmatprep.subr.mxu0 0.0
    %1392 = vmatpush1.msra.mxu0 0.0
    %1393 = vmatprep.subr.mxu0 0.0
    %1394 = vmatpush1.msra.mxu0 0.0
    %1395 = vmatprep.subr.mxu0 0.0
    %1396 = vmatpush1.msra.mxu0 0.0
    %1397 = vmatprep.subr.mxu0 0.0
    %1398 = vmatpush1.msra.mxu0 0.0
    %1399 = vmatprep.subr.mxu0 0.0
    %1400 = vmatpush1.msra.mxu0 0.0
    %1401 = vmatprep.subr.mxu0 0.0
    %1402 = vmatpush1.msra.mxu0 0.0
    %1403 = vmatprep.subr.mxu0 0.0
    %1404 = vmatpush1.msra.mxu0 0.0
    %1405 = vmatprep.subr.mxu0 0.0
    %1406 = vmatpush1.msra.mxu0 0.0
    %1407 = vmatprep.subr.mxu0 0.0
    %1408 = vmatpush1.msra.mxu0 0.0
    %1409 = vmatprep.subr.mxu0 0.0
    %1410 = vmatpush1.msra.mxu0 0.0
    %1411 = vmatprep.subr.mxu0 0.0
    %1412 = vmatpush1.msra.mxu0 0.0
    %1413 = vmatprep.subr.mxu0 0.0
    %1414 = vmatpush1.msra.mxu0 0.0
    %1415 = vmatprep.subr.mxu0 0.0
    %1416 = vmatpush1.msra.mxu0 0.0
    %1417 = vmatprep.subr.mxu0 0.0
    %1418 = vmatpush1.msra.mxu0 0.0
    %1419 = vmatprep.subr.mxu0 0.0
    %1420 = vmatpush1.msra.mxu0 0.0
    %1421 = vmatprep.subr.mxu0 0.0
    %1422 = vmatpush1.msra.mxu0 0.0
    %1423 = vmatprep.subr.mxu0 0.0
    %1424 = vmatpush1.msra.mxu0 0.0
    %1425 = vmatprep.mubr.f32.mxu0 0.0
    %1426 = vmatmul.mubr.f32.gmra.mrb[0].mxu0 %v1353
    %v1427 = vpop.f32.mrb[0].mxu0
    %v1428 = vadd.f32 %v1339, %v1427
    %v1429 = vpop.f32.mrb[0].mxu0
    %1430 = vmatprep.mubr.f32.mxu0 0.0
    %1431 = vmatmul.mubr.f32.gmra.mrb[0].mxu0 %v1355
    %v1432 = vpop.f32.mrb[0].mxu0
    %v1433 = vadd.f32 %v1339, %v1432
    %v1434 = vpop.f32.mrb[0].mxu0
    %1435 = vmatprep.mubr.f32.mxu0 0.0
    %1436 = vmatmul.mubr.f32.gmra.mrb[0].mxu0 %v1357
    %v1437 = vpop.f32.mrb[0].mxu0
    %v1438 = vadd.f32 %v1339, %v1437
    %v1439 = vpop.f32.mrb[0].mxu0
    %1440 = vmatprep.mubr.f32.mxu0 0.0
    %1441 = vmatmul.mubr.f32.gmra.mrb[0].mxu0 %v1359
    %v1442 = vpop.f32.mrb[0].mxu0
    %v1443 = vadd.f32 %v1339, %v1442
    %v1444 = vpop.f32.mrb[0].mxu0
    %1445 = vdwg.mxu0
    %v1446 = vmax.f32 %v1428, 0.0
    %v1447 = vmax.f32 %v1433, 0.0
    %v1448 = vmax.f32 %v1438, 0.0
    %v1449 = vmax.f32 %v1443, 0.0
    %v1450 = vld [vmem:[#allocation14] sm:$0xff]
    %v1451 = vld [vmem:[#allocation14 + $0x8] sm:$0xff]
    %v1452 = vld [vmem:[#allocation14 + $0x10] sm:$0xff]
    %v1453 = vld [vmem:[#allocation14 + $0x18] sm:$0xff]
    %v1454 = vld [vmem:[%s13] sm:$0x1]
    %v1456 = vlaneseq
    %v1457 = vshrl.u32 %v1456, 7
    %v1458 = vsub.s32 0, %v1457
    %v1459 = vrot.slane %v1454, %v1458
    %v1462 = vsel %vm348, %v1446, 0
    %v1465 = vsel %vm348, %v1447, 0
    %v1468 = vsel %vm348, %v1448, 0
    %v1471 = vsel %vm348, %v1449, 0
    %1473 = vmatprep.subr.mxu0 0.0
    %1474 = vmatpush1.msra.mxu0 %v1450
    %1475 = vmatprep.subr.mxu0 0.0
    %1476 = vmatpush1.msra.mxu0 %v1451
    %1477 = vmatprep.subr.mxu0 0.0
    %1478 = vmatpush1.msra.mxu0 %v1452
    %1479 = vmatprep.subr.mxu0 0.0
    %1480 = vmatpush1.msra.mxu0 %v1453
    %1481 = vmatprep.subr.mxu0 0.0
    %1482 = vmatpush1.msra.mxu0 0.0
    %1483 = vmatprep.subr.mxu0 0.0
    %1484 = vmatpush1.msra.mxu0 0.0
    %1485 = vmatprep.subr.mxu0 0.0
    %1486 = vmatpush1.msra.mxu0 0.0
    %1487 = vmatprep.subr.mxu0 0.0
    %1488 = vmatpush1.msra.mxu0 0.0
    %1489 = vmatprep.subr.mxu0 0.0
    %1490 = vmatpush1.msra.mxu0 0.0
    %1491 = vmatprep.subr.mxu0 0.0
    %1492 = vmatpush1.msra.mxu0 0.0
    %1493 = vmatprep.subr.mxu0 0.0
    %1494 = vmatpush1.msra.mxu0 0.0
    %1495 = vmatprep.subr.mxu0 0.0
    %1496 = vmatpush1.msra.mxu0 0.0
    %1497 = vmatprep.subr.mxu0 0.0
    %1498 = vmatpush1.msra.mxu0 0.0
    %1499 = vmatprep.subr.mxu0 0.0
    %1500 = vmatpush1.msra.mxu0 0.0
    %1501 = vmatprep.subr.mxu0 0.0
    %1502 = vmatpush1.msra.mxu0 0.0
    %1503 = vmatprep.subr.mxu0 0.0
    %1504 = vmatpush1.msra.mxu0 0.0
    %1505 = vmatprep.subr.mxu0 0.0
    %1506 = vmatpush1.msra.mxu0 0.0
    %1507 = vmatprep.subr.mxu0 0.0
    %1508 = vmatpush1.msra.mxu0 0.0
    %1509 = vmatprep.subr.mxu0 0.0
    %1510 = vmatpush1.msra.mxu0 0.0
    %1511 = vmatprep.subr.mxu0 0.0
    %1512 = vmatpush1.msra.mxu0 0.0
    %1513 = vmatprep.subr.mxu0 0.0
    %1514 = vmatpush1.msra.mxu0 0.0
    %1515 = vmatprep.subr.mxu0 0.0
    %1516 = vmatpush1.msra.mxu0 0.0
    %1517 = vmatprep.subr.mxu0 0.0
    %1518 = vmatpush1.msra.mxu0 0.0
    %1519 = vmatprep.subr.mxu0 0.0
    %1520 = vmatpush1.msra.mxu0 0.0
    %1521 = vmatprep.subr.mxu0 0.0
    %1522 = vmatpush1.msra.mxu0 0.0
    %1523 = vmatprep.subr.mxu0 0.0
    %1524 = vmatpush1.msra.mxu0 0.0
    %1525 = vmatprep.subr.mxu0 0.0
    %1526 = vmatpush1.msra.mxu0 0.0
    %1527 = vmatprep.subr.mxu0 0.0
    %1528 = vmatpush1.msra.mxu0 0.0
    %1529 = vmatprep.subr.mxu0 0.0
    %1530 = vmatpush1.msra.mxu0 0.0
    %1531 = vmatprep.subr.mxu0 0.0
    %1532 = vmatpush1.msra.mxu0 0.0
    %1533 = vmatprep.subr.mxu0 0.0
    %1534 = vmatpush1.msra.mxu0 0.0
    %1535 = vmatprep.subr.mxu0 0.0
    %1536 = vmatpush1.msra.mxu0 0.0
    %1537 = vmatprep.mubr.f32.mxu0 0.0
    %1538 = vmatmul.mubr.f32.gmra.mrb[0].mxu0 %v1462
    %v1539 = vpop.f32.mrb[0].mxu0
    %v1540 = vadd.f32 %v1459, %v1539
    %v1541 = vpop.f32.mrb[0].mxu0
    %1542 = vmatprep.mubr.f32.mxu0 0.0
    %1543 = vmatmul.mubr.f32.gmra.mrb[0].mxu0 %v1465
    %v1544 = vpop.f32.mrb[0].mxu0
    %v1545 = vadd.f32 %v1459, %v1544
    %v1546 = vpop.f32.mrb[0].mxu0
    %1547 = vmatprep.mubr.f32.mxu0 0.0
    %1548 = vmatmul.mubr.f32.gmra.mrb[0].mxu0 %v1468
    %v1549 = vpop.f32.mrb[0].mxu0
    %v1550 = vadd.f32 %v1459, %v1549
    %v1551 = vpop.f32.mrb[0].mxu0
    %1552 = vmatprep.mubr.f32.mxu0 0.0
    %1553 = vmatmul.mubr.f32.gmra.mrb[0].mxu0 %v1471
    %v1554 = vpop.f32.mrb[0].mxu0
    %v1555 = vadd.f32 %v1459, %v1554
    %v1556 = vpop.f32.mrb[0].mxu0
    %1557 = vdwg.mxu0
    %v1558 = vld [vmem:[#allocation16] sm:$0xff]
    %v1559 = vld [vmem:[#allocation16 + $0x8] sm:$0xff]
    %v1560 = vld [vmem:[#allocation16 + $0x10] sm:$0xff]
    %v1561 = vld [vmem:[#allocation16 + $0x18] sm:$0xff]
    %v1563 = vsel %vm348, %v1540, 0
    %v1566 = vsel %vm348, %v1545, 0
    %v1569 = vsel %vm348, %v1550, 0
    %v1572 = vsel %vm348, %v1555, 0
    %1574 = vmatprep.subr.mxu0 0.0
    %1575 = vmatpush1.msra.mxu0 %v1558
    %1576 = vmatprep.subr.mxu0 0.0
    %1577 = vmatpush1.msra.mxu0 %v1559
    %1578 = vmatprep.subr.mxu0 0.0
    %1579 = vmatpush1.msra.mxu0 %v1560
    %1580 = vmatprep.subr.mxu0 0.0
    %1581 = vmatpush1.msra.mxu0 %v1561
    %1582 = vmatprep.subr.mxu0 0.0
    %1583 = vmatpush1.msra.mxu0 0.0
    %1584 = vmatprep.subr.mxu0 0.0
    %1585 = vmatpush1.msra.mxu0 0.0
    %1586 = vmatprep.subr.mxu0 0.0
    %1587 = vmatpush1.msra.mxu0 0.0
    %1588 = vmatprep.subr.mxu0 0.0
    %1589 = vmatpush1.msra.mxu0 0.0
    %1590 = vmatprep.subr.mxu0 0.0
    %1591 = vmatpush1.msra.mxu0 0.0
    %1592 = vmatprep.subr.mxu0 0.0
    %1593 = vmatpush1.msra.mxu0 0.0
    %1594 = vmatprep.subr.mxu0 0.0
    %1595 = vmatpush1.msra.mxu0 0.0
    %1596 = vmatprep.subr.mxu0 0.0
    %1597 = vmatpush1.msra.mxu0 0.0
    %1598 = vmatprep.subr.mxu0 0.0
    %1599 = vmatpush1.msra.mxu0 0.0
    %1600 = vmatprep.subr.mxu0 0.0
    %1601 = vmatpush1.msra.mxu0 0.0
    %1602 = vmatprep.subr.mxu0 0.0
    %1603 = vmatpush1.msra.mxu0 0.0
    %1604 = vmatprep.subr.mxu0 0.0
    %1605 = vmatpush1.msra.mxu0 0.0
    %1606 = vmatprep.subr.mxu0 0.0
    %1607 = vmatpush1.msra.mxu0 0.0
    %1608 = vmatprep.subr.mxu0 0.0
    %1609 = vmatpush1.msra.mxu0 0.0
    %1610 = vmatprep.subr.mxu0 0.0
    %1611 = vmatpush1.msra.mxu0 0.0
    %1612 = vmatprep.subr.mxu0 0.0
    %1613 = vmatpush1.msra.mxu0 0.0
    %1614 = vmatprep.subr.mxu0 0.0
    %1615 = vmatpush1.msra.mxu0 0.0
    %1616 = vmatprep.subr.mxu0 0.0
    %1617 = vmatpush1.msra.mxu0 0.0
    %1618 = vmatprep.subr.mxu0 0.0
    %1619 = vmatpush1.msra.mxu0 0.0
    %1620 = vmatprep.subr.mxu0 0.0
    %1621 = vmatpush1.msra.mxu0 0.0
    %1622 = vmatprep.subr.mxu0 0.0
    %1623 = vmatpush1.msra.mxu0 0.0
    %1624 = vmatprep.subr.mxu0 0.0
    %1625 = vmatpush1.msra.mxu0 0.0
    %1626 = vmatprep.subr.mxu0 0.0
    %1627 = vmatpush1.msra.mxu0 0.0
    %1628 = vmatprep.subr.mxu0 0.0
    %1629 = vmatpush1.msra.mxu0 0.0
    %1630 = vmatprep.subr.mxu0 0.0
    %1631 = vmatpush1.msra.mxu0 0.0
    %1632 = vmatprep.subr.mxu0 0.0
    %1633 = vmatpush1.msra.mxu0 0.0
    %1634 = vmatprep.subr.mxu0 0.0
    %1635 = vmatpush1.msra.mxu0 0.0
    %1636 = vmatprep.subr.mxu0 0.0
    %1637 = vmatpush1.msra.mxu0 0.0
    %1638 = vmatprep.mubr.f32.mxu0 0.0
    %1639 = vmatmul.mubr.f32.gmra.mrb[0].mxu0 %v1563
    %v1640 = vpop.f32.mrb[0].mxu0
    %v1641 = vadd.f32 0.0, %v1640
    %v1642 = vpop.f32.mrb[0].mxu0
    %1643 = vmatprep.mubr.f32.mxu0 0.0
    %1644 = vmatmul.mubr.f32.gmra.mrb[0].mxu0 %v1566
    %v1645 = vpop.f32.mrb[0].mxu0
    %v1646 = vadd.f32 0.0, %v1645
    %v1647 = vpop.f32.mrb[0].mxu0
    %1648 = vmatprep.mubr.f32.mxu0 0.0
    %1649 = vmatmul.mubr.f32.gmra.mrb[0].mxu0 %v1569
    %v1650 = vpop.f32.mrb[0].mxu0
    %v1651 = vadd.f32 0.0, %v1650
    %v1652 = vpop.f32.mrb[0].mxu0
    %1653 = vmatprep.mubr.f32.mxu0 0.0
    %1654 = vmatmul.mubr.f32.gmra.mrb[0].mxu0 %v1572
    %v1655 = vpop.f32.mrb[0].mxu0
    %v1656 = vadd.f32 0.0, %v1655
    %v1657 = vpop.f32.mrb[0].mxu0
    %1658 = vdwg.mxu0
    %v1659 = vld [vmem:[#allocation17] sm:$0xff]
    %v1660 = vld [vmem:[#allocation17 + $0x8] sm:$0xff]
    %v1661 = vld [vmem:[#allocation17 + $0x10] sm:$0xff]
    %v1662 = vld [vmem:[#allocation17 + $0x18] sm:$0xff]
    %v1663 = vmul.f32 %v1641, %v1659
    %v1664 = vmul.f32 %v1646, %v1660
    %v1665 = vmul.f32 %v1651, %v1661
    %v1666 = vmul.f32 %v1656, %v1662
    %v1667 = vld [vmem:[#allocation19] sm:$0xff]
    %v1668 = vld [vmem:[#allocation19 + $0x8] sm:$0xff]
    %v1669 = vld [vmem:[#allocation19 + $0x10] sm:$0xff]
    %v1670 = vld [vmem:[#allocation19 + $0x18] sm:$0xff]
    %v1671 = vld [vmem:[#allocation19 + $0x20] sm:$0xff]
    %v1672 = vld [vmem:[#allocation19 + $0x28] sm:$0xff]
    %vm1673 = vcmask 392192
    %v1675 = vsel %vm1673, %v1663, 0
    %v1678 = vsel %vm1673, %v1664, 0
    %v1681 = vsel %vm1673, %v1665, 0
    %v1684 = vsel %vm1673, %v1666, 0
    %1686 = vmatprep.subr.mxu0 0.0
    %1687 = vmatpush1.msra.mxu0 %v1667
    %1688 = vmatprep.subr.mxu0 0.0
    %1689 = vmatpush1.msra.mxu0 %v1668
    %1690 = vmatprep.subr.mxu0 0.0
    %1691 = vmatpush1.msra.mxu0 %v1669
    %1692 = vmatprep.subr.mxu0 0.0
    %1693 = vmatpush1.msra.mxu0 %v1670
    %1694 = vmatprep.subr.mxu0 0.0
    %1695 = vmatpush1.msra.mxu0 %v1671
    %1696 = vmatprep.subr.mxu0 0.0
    %1697 = vmatpush1.msra.mxu0 %v1672
    %1698 = vmatprep.subr.mxu0 0.0
    %1699 = vmatpush1.msra.mxu0 0.0
    %1700 = vmatprep.subr.mxu0 0.0
    %1701 = vmatpush1.msra.mxu0 0.0
    %1702 = vmatprep.subr.mxu0 0.0
    %1703 = vmatpush1.msra.mxu0 0.0
    %1704 = vmatprep.subr.mxu0 0.0
    %1705 = vmatpush1.msra.mxu0 0.0
    %1706 = vmatprep.subr.mxu0 0.0
    %1707 = vmatpush1.msra.mxu0 0.0
    %1708 = vmatprep.subr.mxu0 0.0
    %1709 = vmatpush1.msra.mxu0 0.0
    %1710 = vmatprep.subr.mxu0 0.0
    %1711 = vmatpush1.msra.mxu0 0.0
    %1712 = vmatprep.subr.mxu0 0.0
    %1713 = vmatpush1.msra.mxu0 0.0
    %1714 = vmatprep.subr.mxu0 0.0
    %1715 = vmatpush1.msra.mxu0 0.0
    %1716 = vmatprep.subr.mxu0 0.0
    %1717 = vmatpush1.msra.mxu0 0.0
    %1718 = vmatprep.subr.mxu0 0.0
    %1719 = vmatpush1.msra.mxu0 0.0
    %1720 = vmatprep.subr.mxu0 0.0
    %1721 = vmatpush1.msra.mxu0 0.0
    %1722 = vmatprep.subr.mxu0 0.0
    %1723 = vmatpush1.msra.mxu0 0.0
    %1724 = vmatprep.subr.mxu0 0.0
    %1725 = vmatpush1.msra.mxu0 0.0
    %1726 = vmatprep.subr.mxu0 0.0
    %1727 = vmatpush1.msra.mxu0 0.0
    %1728 = vmatprep.subr.mxu0 0.0
    %1729 = vmatpush1.msra.mxu0 0.0
    %1730 = vmatprep.subr.mxu0 0.0
    %1731 = vmatpush1.msra.mxu0 0.0
    %1732 = vmatprep.subr.mxu0 0.0
    %1733 = vmatpush1.msra.mxu0 0.0
    %1734 = vmatprep.subr.mxu0 0.0
    %1735 = vmatpush1.msra.mxu0 0.0
    %1736 = vmatprep.subr.mxu0 0.0
    %1737 = vmatpush1.msra.mxu0 0.0
    %1738 = vmatprep.subr.mxu0 0.0
    %1739 = vmatpush1.msra.mxu0 0.0
    %1740 = vmatprep.subr.mxu0 0.0
    %1741 = vmatpush1.msra.mxu0 0.0
    %1742 = vmatprep.subr.mxu0 0.0
    %1743 = vmatpush1.msra.mxu0 0.0
    %1744 = vmatprep.subr.mxu0 0.0
    %1745 = vmatpush1.msra.mxu0 0.0
    %1746 = vmatprep.subr.mxu0 0.0
    %1747 = vmatpush1.msra.mxu0 0.0
    %1748 = vmatprep.subr.mxu0 0.0
    %1749 = vmatpush1.msra.mxu0 0.0
    %1750 = vmatprep.mubr.f32.mxu0 0.0
    %1751 = vmatmul.mubr.f32.gmra.mrb[0].mxu0 %v1675
    %v1752 = vpop.f32.mrb[0].mxu0
    %v1753 = vadd.f32 0.0, %v1752
    %v1754 = vpop.f32.mrb[0].mxu0
    %1755 = vmatprep.mubr.f32.mxu0 0.0
    %1756 = vmatmul.mubr.f32.gmra.mrb[0].mxu0 %v1678
    %v1757 = vpop.f32.mrb[0].mxu0
    %v1758 = vadd.f32 0.0, %v1757
    %v1759 = vpop.f32.mrb[0].mxu0
    %1760 = vmatprep.mubr.f32.mxu0 0.0
    %1761 = vmatmul.mubr.f32.gmra.mrb[0].mxu0 %v1681
    %v1762 = vpop.f32.mrb[0].mxu0
    %v1763 = vadd.f32 0.0, %v1762
    %v1764 = vpop.f32.mrb[0].mxu0
    %1765 = vmatprep.mubr.f32.mxu0 0.0
    %1766 = vmatmul.mubr.f32.gmra.mrb[0].mxu0 %v1684
    %v1767 = vpop.f32.mrb[0].mxu0
    %v1768 = vadd.f32 0.0, %v1767
    %v1769 = vpop.f32.mrb[0].mxu0
    %1770 = vdwg.mxu0
    %v1771 = vld [vmem:[%s16] sm:$0x3]
    %v1772 = vld [vmem:[%s18] sm:$0x1]
    %v1774 = vlaneseq
    %v1775 = vshrl.u32 %v1774, 7
    %v1776 = vsub.s32 0, %v1775
    %v1777 = vrot.slane %v1772, %v1776
    %v1780 = vsel %vm348, %v1771, 0
    %1782 = vmatprep.subr.mxu0 0.0
    %1783 = vmatpush1.msra.mxu0 %v1753
    %1784 = vmatprep.subr.mxu0 0.0
    %1785 = vmatpush1.msra.mxu0 %v1758
    %1786 = vmatprep.subr.mxu0 0.0
    %1787 = vmatpush1.msra.mxu0 %v1763
    %1788 = vmatprep.subr.mxu0 0.0
    %1789 = vmatpush1.msra.mxu0 %v1768
    %1790 = vmatprep.subr.mxu0 0.0
    %1791 = vmatpush1.msra.mxu0 0.0
    %1792 = vmatprep.subr.mxu0 0.0
    %1793 = vmatpush1.msra.mxu0 0.0
    %1794 = vmatprep.subr.mxu0 0.0
    %1795 = vmatpush1.msra.mxu0 0.0
    %1796 = vmatprep.subr.mxu0 0.0
    %1797 = vmatpush1.msra.mxu0 0.0
    %1798 = vmatprep.subr.mxu0 0.0
    %1799 = vmatpush1.msra.mxu0 0.0
    %1800 = vmatprep.subr.mxu0 0.0
    %1801 = vmatpush1.msra.mxu0 0.0
    %1802 = vmatprep.subr.mxu0 0.0
    %1803 = vmatpush1.msra.mxu0 0.0
    %1804 = vmatprep.subr.mxu0 0.0
    %1805 = vmatpush1.msra.mxu0 0.0
    %1806 = vmatprep.subr.mxu0 0.0
    %1807 = vmatpush1.msra.mxu0 0.0
    %1808 = vmatprep.subr.mxu0 0.0
    %1809 = vmatpush1.msra.mxu0 0.0
    %1810 = vmatprep.subr.mxu0 0.0
    %1811 = vmatpush1.msra.mxu0 0.0
    %1812 = vmatprep.subr.mxu0 0.0
    %1813 = vmatpush1.msra.mxu0 0.0
    %1814 = vmatprep.subr.mxu0 0.0
    %1815 = vmatpush1.msra.mxu0 0.0
    %1816 = vmatprep.subr.mxu0 0.0
    %1817 = vmatpush1.msra.mxu0 0.0
    %1818 = vmatprep.subr.mxu0 0.0
    %1819 = vmatpush1.msra.mxu0 0.0
    %1820 = vmatprep.subr.mxu0 0.0
    %1821 = vmatpush1.msra.mxu0 0.0
    %1822 = vmatprep.subr.mxu0 0.0
    %1823 = vmatpush1.msra.mxu0 0.0
    %1824 = vmatprep.subr.mxu0 0.0
    %1825 = vmatpush1.msra.mxu0 0.0
    %1826 = vmatprep.subr.mxu0 0.0
    %1827 = vmatpush1.msra.mxu0 0.0
    %1828 = vmatprep.subr.mxu0 0.0
    %1829 = vmatpush1.msra.mxu0 0.0
    %1830 = vmatprep.subr.mxu0 0.0
    %1831 = vmatpush1.msra.mxu0 0.0
    %1832 = vmatprep.subr.mxu0 0.0
    %1833 = vmatpush1.msra.mxu0 0.0
    %1834 = vmatprep.subr.mxu0 0.0
    %1835 = vmatpush1.msra.mxu0 0.0
    %1836 = vmatprep.subr.mxu0 0.0
    %1837 = vmatpush1.msra.mxu0 0.0
    %1838 = vmatprep.subr.mxu0 0.0
    %1839 = vmatpush1.msra.mxu0 0.0
    %1840 = vmatprep.subr.mxu0 0.0
    %1841 = vmatpush1.msra.mxu0 0.0
    %1842 = vmatprep.subr.mxu0 0.0
    %1843 = vmatpush1.msra.mxu0 0.0
    %1844 = vmatprep.subr.mxu0 0.0
    %1845 = vmatpush1.msra.mxu0 0.0
    %1846 = vmatprep.mubr.f32.mxu0 0.0
    %1847 = vmatmul.mubr.f32.gmra.mrb[0].mxu0 %v1780
    %v1848 = vpop.f32.mrb[0].mxu0
    %v1849 = vadd.f32 %v1777, %v1848
    %v1850 = vpop.f32.mrb[0].mxu0
    %1851 = vdwg.mxu0
    %1852 = vst [vmem:[#allocation20] sm:$0x3] %v1849
    // Predicated region
    $region122: #{tpu_custom_call.1} parent=1 // pred_check
      _
    $region123: #{tpu_custom_call.1} parent=1 // pred_check_branch
      %1854 = sbr.rel (0) target = $region125
    $region124: #{tpu_custom_call.1} parent=1 // pred_region
      %s1856 = ssub.s32 32, 32
      %1857 = vsyncadd [#allocation4], %s1856
      %s1859 = sshll.u32 [#allocation20], 4
      %s1860 = int_to_ptr.vmem [resolvable:$true] %s1859
      %1862 = dma.vmem_to_hbm [thread:$0]  %s1860, 32, %s19, [#allocation4]
    $region125: #{tpu_custom_call.1} parent=1 // pred_fallthru
      _
    // Predicated region
    $region126: #{tpu_custom_call.1} parent=1 // pred_check
      _
    $region127: #{tpu_custom_call.1} parent=1 // pred_check_branch
      %1864 = sbr.rel (0) target = $region129
    $region128: #{tpu_custom_call.1} parent=1 // pred_region
      %1865 = dma.done [#allocation4], 32
    $region129: #{tpu_custom_call.1} parent=1 // pred_fallthru
      _
    %1866 = vsyncpa [#allocation3], 1
    %1867 = vsyncpa [#allocation6], 1
    %1868 = vsyncpa [#allocation9], 1
    %1869 = vsyncpa [#allocation12], 1
    %1870 = vsyncpa [#allocation15], 1
    %1871 = vsyncpa [#allocation18], 1
    %1872 = vsyncpa [#allocation4], 1

</llo_original>
